<compile_context>
chip_gen: v5e
topology: v5e:2x2
jax: 0.10.0
libtpu: 0.0.40
codegen_flags: <defaults>
</compile_context>

<pallas_src>
import jax
import jax.numpy as jnp
from jax.experimental import pallas as pl
from jax.experimental.pallas import tpu as pltpu

# ---- sizes (small, consistent with the module) -------------------------------
N = 8            # number of drugs (batch)
D_KIN = 64       # args.ori_dim_dict['kinome']
M = 8            # nodes per drug graph
F_IN = 32        # args.GATts_indim
F_GAT = 978      # GATts output dim per drug (reshape([-1, 978]))
F_PAD = 1024     # F_GAT zero-padded to a multiple of 128 lanes
D_OUT = 32       # args.single_drug_feat_dim
NM = N * M


# =============================================================================
# Fused kernel: kinome MLP branch + batched (block-diagonal) GAT branch,
# writing one lane-dense (N, 2*D_OUT) output block.
# =============================================================================
def mfu_fused_kernel(x_kin_ref, w1_ref, b1_ref, w2_ref, b2_ref, w3t_ref, b3t_ref,
                     xn_ref, adjb_ref, wsrc_ref, wdst_ref, wg_ref, pool_ref,
                     wt_ref, btg_ref, out_ref):
    # --- kinome branch: 3-layer MLP, mFU Linear folded into layer 3 -----------
    h = jnp.dot(x_kin_ref[...], w1_ref[...], preferred_element_type=jnp.float32) + b1_ref[...]
    h = jnp.maximum(h, 0.0)
    h = jnp.dot(h, w2_ref[...], preferred_element_type=jnp.float32) + b2_ref[...]
    h = jnp.maximum(h, 0.0)
    # TODO(synk): if the reference MLPtorch ends with an activation, the w3@wt fold is invalid.
    y_kin = jnp.dot(h, w3t_ref[...], preferred_element_type=jnp.float32) + b3t_ref[...]

    # --- GATtsall branch: all N graphs batched via block-diagonal adjacency ---
    x = xn_ref[...]                                                      # (NM, F_IN)
    hg = jnp.dot(x, wg_ref[...], preferred_element_type=jnp.float32)     # (NM, F_PAD)
    # attention logits with a-vectors folded through W (exact):
    #   e_ij = LeakyReLU( (x_i @ W) . a_src + (x_j @ W) . a_dst )
    es = jnp.dot(x, wsrc_ref[...], preferred_element_type=jnp.float32)   # (NM, 1)
    ed = jnp.dot(x, wdst_ref[...], preferred_element_type=jnp.float32)   # (NM, 1)
    e = es + jnp.swapaxes(ed, 0, 1)                                      # (NM, NM)
    e = jnp.where(e > 0, e, 0.2 * e)                                     # LeakyReLU(0.2)
    mask = adjb_ref[...] > 0.0                                           # block-diag adjacency
    e = jnp.where(mask, e, -1e30)
    e = e - jnp.max(e, axis=-1, keepdims=True)
    p = jnp.where(mask, jnp.exp(e), 0.0)
    attn = p / (jnp.sum(p, axis=-1, keepdims=True) + 1e-9)               # softmax over neighbors
    hp = jnp.dot(attn, hg, preferred_element_type=jnp.float32)           # (NM, F_PAD)
    hp = jnp.where(hp > 0, hp, jnp.exp(jnp.minimum(hp, 0.0)) - 1.0)      # ELU
    # per-graph mean readout as one pooling matmul (MXU, not sublane reduces)
    g = jnp.dot(pool_ref[...], hp, preferred_element_type=jnp.float32)   # (N, F_PAD)
    # mFU_transform_modules['GATtsall'] : Linear(978 -> D_OUT) (padded rows are zero)
    y_gat = jnp.dot(g, wt_ref[...], preferred_element_type=jnp.float32) + btg_ref[...]

    # torch.concat([kinome, GATtsall], dim=1) -> single lane-dense store
    out_ref[...] = jnp.concatenate([y_kin, y_gat], axis=1).astype(out_ref.dtype)


def _vmem():
    return pl.BlockSpec(memory_space=pltpu.MemorySpace.VMEM)


# =============================================================================
# Host-side parameter folding / padding (exact algebraic rewrites, done once)
# =============================================================================
def prepare_params(kin_params, gat_params):
    w1, b1, w2, b2, w3, b3, wt_k, bt_k = kin_params
    w_gat, a_src, a_dst, wt_g, bt_g = gat_params
    # kinome: no nonlinearity between MLP layer 3 and the mFU Linear -> fold exactly.
    w3t = w3 @ wt_k                      # (D_KIN, D_OUT)
    b3t = b3 @ wt_k + bt_k               # (1, D_OUT)
    # GAT: fold attention vectors through the input projection (no nonlinearity between).
    w_src = w_gat @ a_src.reshape(F_GAT, 1)   # (F_IN, 1)
    w_dst = w_gat @ a_dst.reshape(F_GAT, 1)   # (F_IN, 1)
    # zero-pad the 978-wide feature axis to 1024 lanes (padded cols/rows are zero -> exact).
    w_gat_pad = jnp.pad(w_gat, ((0, 0), (0, F_PAD - F_GAT)))
    wt_pad = jnp.pad(wt_g, ((0, F_PAD - F_GAT), (0, 0)))
    return (w1, b1, w2, b2, w3t, b3t, w_src, w_dst, w_gat_pad, wt_pad, bt_g)


# =============================================================================
# mFU.forward: one fused pallas_call producing the concatenated (N, 2*D_OUT) output
# =============================================================================
@jax.jit
def mfu_forward(x_kin, x_nodes, adj, fused_params):
    (w1, b1, w2, b2, w3t, b3t,
     w_src, w_dst, w_gat_pad, wt_pad, bt_g) = fused_params

    xn_flat = x_nodes.reshape(NM, F_IN)
    # block-diagonal adjacency so all N graphs share one attention/softmax pass
    idx = jnp.arange(NM)
    g_id, n_id = idx // M, idx % M
    same_graph = g_id[:, None] == g_id[None, :]
    adj_block = jnp.where(same_graph,
                          adj[g_id[:, None], n_id[:, None], n_id[None, :]],
                          0.0)                                        # (NM, NM)
    # per-graph mean-readout pooling matrix
    pool = (jnp.arange(N)[:, None] == g_id[None, :]).astype(jnp.float32) / M   # (N, NM)

    return pl.pallas_call(
        mfu_fused_kernel,
        out_shape=jax.ShapeDtypeStruct((N, 2 * D_OUT), jnp.float32),
        in_specs=[_vmem() for _ in range(15)],
        out_specs=_vmem(),
    )(x_kin, w1, b1, w2, b2, w3t, b3t,
      xn_flat, adj_block, w_src, w_dst, w_gat_pad, pool, wt_pad, bt_g)


# =============================================================================
# Pure-JAX reference (unfused, per-graph) for correctness checking
# =============================================================================
def mfu_reference(x_kin, x_nodes, adj, kin_params, gat_params):
    w1, b1, w2, b2, w3, b3, wt_k, bt_k = kin_params
    w_gat, a_src, a_dst, wt_g, bt_g = gat_params

    h = jnp.maximum(x_kin @ w1 + b1, 0.0)
    h = jnp.maximum(h @ w2 + b2, 0.0)
    h = h @ w3 + b3
    y_kin = h @ wt_k + bt_k

    def one_graph(x, a):
        hg = x @ w_gat
        es = jnp.sum(hg * a_src, axis=-1, keepdims=True)
        ed = jnp.sum(hg * a_dst, axis=-1, keepdims=True)
        e = es + ed.T
        e = jnp.where(e > 0, e, 0.2 * e)
        mask = a > 0.0
        e = jnp.where(mask, e, -1e30)
        e = e - jnp.max(e, axis=-1, keepdims=True)
        p = jnp.where(mask, jnp.exp(e), 0.0)
        attn = p / (jnp.sum(p, axis=-1, keepdims=True) + 1e-9)
        hp = attn @ hg
        hp = jnp.where(hp > 0, hp, jnp.exp(jnp.minimum(hp, 0.0)) - 1.0)
        return jnp.mean(hp, axis=0)

    g = jax.vmap(one_graph)(x_nodes, adj)        # (N, F_GAT)
    y_gat = g @ wt_g + bt_g
    return jnp.concatenate([y_kin, y_gat], axis=1)


def init_params(key):
    ks = jax.random.split(key, 13)
    s = 0.05
    kin = (
        s * jax.random.normal(ks[0], (D_KIN, D_KIN), jnp.float32),
        s * jax.random.normal(ks[1], (1, D_KIN), jnp.float32),
        s * jax.random.normal(ks[2], (D_KIN, D_KIN), jnp.float32),
        s * jax.random.normal(ks[3], (1, D_KIN), jnp.float32),
        s * jax.random.normal(ks[4], (D_KIN, D_KIN), jnp.float32),
        s * jax.random.normal(ks[5], (1, D_KIN), jnp.float32),
        s * jax.random.normal(ks[6], (D_KIN, D_OUT), jnp.float32),
        s * jax.random.normal(ks[7], (1, D_OUT), jnp.float32),
    )
    gat = (
        s * jax.random.normal(ks[8], (F_IN, F_GAT), jnp.float32),
        s * jax.random.normal(ks[9], (1, F_GAT), jnp.float32),
        s * jax.random.normal(ks[10], (1, F_GAT), jnp.float32),
        s * jax.random.normal(ks[11], (F_GAT, D_OUT), jnp.float32),
        s * jax.random.normal(ks[12], (1, D_OUT), jnp.float32),
    )
    return kin, gat


if __name__ == "__main__":
    keys = jax.random.split(jax.random.PRNGKey(0), 4)
    kin_params, gat_params = init_params(keys[0])

    x_kin = jax.random.normal(keys[1], (N, D_KIN), jnp.float32)
    x_nodes = jax.random.normal(keys[2], (N, M, F_IN), jnp.float32)
    # deterministic adjacency: random edges + self loops, values in {0, 1}
    adj = (jax.random.uniform(keys[3], (N, M, M)) > 0.5).astype(jnp.float32)
    adj = jnp.clip(adj + jnp.eye(M, dtype=jnp.float32)[None, :, :], 0.0, 1.0)

    fused_params = prepare_params(kin_params, gat_params)
    out = mfu_forward(x_kin, x_nodes, adj, fused_params)
    out = jax.block_until_ready(out)

    assert out.shape == (N, 2 * D_OUT), out.shape
    assert bool(jnp.all(jnp.isfinite(out)))

    ref = mfu_reference(x_kin, x_nodes, adj, kin_params, gat_params)
    max_err = float(jnp.max(jnp.abs(out - ref)))
    assert max_err < 1e-3, max_err

    print("KERNEL_OK")
</pallas_src>

<mosaic_0001>
module attributes {stable_mosaic.version = 11 : i64} {
  func.func @mfu_fused_kernel(%arg0: memref<8x64xf32, #tpu.memory_space<vmem>>, %arg1: memref<64x64xf32, #tpu.memory_space<vmem>>, %arg2: memref<1x64xf32, #tpu.memory_space<vmem>>, %arg3: memref<64x64xf32, #tpu.memory_space<vmem>>, %arg4: memref<1x64xf32, #tpu.memory_space<vmem>>, %arg5: memref<64x32xf32, #tpu.memory_space<vmem>>, %arg6: memref<1x32xf32, #tpu.memory_space<vmem>>, %arg7: memref<64x32xf32, #tpu.memory_space<vmem>>, %arg8: memref<64x64xf32, #tpu.memory_space<vmem>>, %arg9: memref<32x1xf32, #tpu.memory_space<vmem>>, %arg10: memref<32x1xf32, #tpu.memory_space<vmem>>, %arg11: memref<32x1024xf32, #tpu.memory_space<vmem>>, %arg12: memref<8x64xf32, #tpu.memory_space<vmem>>, %arg13: memref<1024x32xf32, #tpu.memory_space<vmem>>, %arg14: memref<1x32xf32, #tpu.memory_space<vmem>>, %arg15: memref<8x64xf32, #tpu.memory_space<vmem>>) attributes {dimension_semantics = [], scalar_prefetch = 0 : i64, scratch_operands = 0 : i64, tpu.core_type = #tpu.core_type<tc>} {
    %c0 = arith.constant 0 : index
    %c0_0 = arith.constant 0 : index
    %0 = vector.load %arg0[%c0, %c0_0] : memref<8x64xf32, #tpu.memory_space<vmem>>, vector<8x64xf32>
    %c0_1 = arith.constant 0 : index
    %c0_2 = arith.constant 0 : index
    %1 = vector.load %arg1[%c0_1, %c0_2] : memref<64x64xf32, #tpu.memory_space<vmem>>, vector<64x64xf32>
    %cst = arith.constant dense<0.000000e+00> : vector<8x64xf32>
    %2 = tpu.matmul %0, %1, %cst {dimension_numbers = #tpu.dot_dimension_numbers<[1], [0], [0], [1], [0, 0, 1, 1], [], []>} : vector<8x64xf32>, vector<64x64xf32>, vector<8x64xf32> -> vector<8x64xf32>
    %c0_3 = arith.constant 0 : index
    %c0_4 = arith.constant 0 : index
    %3 = vector.load %arg2[%c0_3, %c0_4] : memref<1x64xf32, #tpu.memory_space<vmem>>, vector<1x64xf32>
    %4 = vector.broadcast %3 : vector<1x64xf32> to vector<8x64xf32>
    %5 = arith.addf %2, %4 : vector<8x64xf32>
    %cst_5 = arith.constant 0.000000e+00 : f32
    %6 = vector.broadcast %cst_5 : f32 to vector<8x64xf32>
    %7 = arith.maximumf %5, %6 : vector<8x64xf32>
    %c0_6 = arith.constant 0 : index
    %c0_7 = arith.constant 0 : index
    %8 = vector.load %arg3[%c0_6, %c0_7] : memref<64x64xf32, #tpu.memory_space<vmem>>, vector<64x64xf32>
    %cst_8 = arith.constant dense<0.000000e+00> : vector<8x64xf32>
    %9 = tpu.matmul %7, %8, %cst_8 {dimension_numbers = #tpu.dot_dimension_numbers<[1], [0], [0], [1], [0, 0, 1, 1], [], []>} : vector<8x64xf32>, vector<64x64xf32>, vector<8x64xf32> -> vector<8x64xf32>
    %c0_9 = arith.constant 0 : index
    %c0_10 = arith.constant 0 : index
    %10 = vector.load %arg4[%c0_9, %c0_10] : memref<1x64xf32, #tpu.memory_space<vmem>>, vector<1x64xf32>
    %11 = vector.broadcast %10 : vector<1x64xf32> to vector<8x64xf32>
    %12 = arith.addf %9, %11 : vector<8x64xf32>
    %cst_11 = arith.constant 0.000000e+00 : f32
    %13 = vector.broadcast %cst_11 : f32 to vector<8x64xf32>
    %14 = arith.maximumf %12, %13 : vector<8x64xf32>
    %c0_12 = arith.constant 0 : index
    %c0_13 = arith.constant 0 : index
    %15 = vector.load %arg5[%c0_12, %c0_13] : memref<64x32xf32, #tpu.memory_space<vmem>>, vector<64x32xf32>
    %cst_14 = arith.constant dense<0.000000e+00> : vector<8x32xf32>
    %16 = tpu.matmul %14, %15, %cst_14 {dimension_numbers = #tpu.dot_dimension_numbers<[1], [0], [0], [1], [0, 0, 1, 1], [], []>} : vector<8x64xf32>, vector<64x32xf32>, vector<8x32xf32> -> vector<8x32xf32>
    %c0_15 = arith.constant 0 : index
    %c0_16 = arith.constant 0 : index
    %17 = vector.load %arg6[%c0_15, %c0_16] : memref<1x32xf32, #tpu.memory_space<vmem>>, vector<1x32xf32>
    %18 = vector.broadcast %17 : vector<1x32xf32> to vector<8x32xf32>
    %19 = arith.addf %16, %18 : vector<8x32xf32>
    %c0_17 = arith.constant 0 : index
    %c0_18 = arith.constant 0 : index
    %20 = vector.load %arg7[%c0_17, %c0_18] : memref<64x32xf32, #tpu.memory_space<vmem>>, vector<64x32xf32>
    %c0_19 = arith.constant 0 : index
    %c0_20 = arith.constant 0 : index
    %21 = vector.load %arg11[%c0_19, %c0_20] : memref<32x1024xf32, #tpu.memory_space<vmem>>, vector<32x1024xf32>
    %cst_21 = arith.constant dense<0.000000e+00> : vector<64x1024xf32>
    %22 = tpu.matmul %20, %21, %cst_21 {dimension_numbers = #tpu.dot_dimension_numbers<[1], [0], [0], [1], [0, 0, 1, 1], [], []>} : vector<64x32xf32>, vector<32x1024xf32>, vector<64x1024xf32> -> vector<64x1024xf32>
    %c0_22 = arith.constant 0 : index
    %c0_23 = arith.constant 0 : index
    %23 = vector.load %arg9[%c0_22, %c0_23] : memref<32x1xf32, #tpu.memory_space<vmem>>, vector<32x1xf32>
    %cst_24 = arith.constant dense<0.000000e+00> : vector<64x1xf32>
    %24 = tpu.matmul %20, %23, %cst_24 {dimension_numbers = #tpu.dot_dimension_numbers<[1], [0], [0], [1], [0, 0, 1, 1], [], []>} : vector<64x32xf32>, vector<32x1xf32>, vector<64x1xf32> -> vector<64x1xf32>
    %c0_25 = arith.constant 0 : index
    %c0_26 = arith.constant 0 : index
    %25 = vector.load %arg10[%c0_25, %c0_26] : memref<32x1xf32, #tpu.memory_space<vmem>>, vector<32x1xf32>
    %cst_27 = arith.constant dense<0.000000e+00> : vector<64x1xf32>
    %26 = tpu.matmul %20, %25, %cst_27 {dimension_numbers = #tpu.dot_dimension_numbers<[1], [0], [0], [1], [0, 0, 1, 1], [], []>} : vector<64x32xf32>, vector<32x1xf32>, vector<64x1xf32> -> vector<64x1xf32>
    %27 = tpu.transpose %26, [1, 0] : vector<64x1xf32> -> vector<1x64xf32>
    %28 = vector.broadcast %24 : vector<64x1xf32> to vector<64x64xf32>
    %29 = vector.broadcast %27 : vector<1x64xf32> to vector<64x64xf32>
    %30 = arith.addf %28, %29 : vector<64x64xf32>
    %cst_28 = arith.constant 0.000000e+00 : f32
    %31 = vector.broadcast %cst_28 : f32 to vector<64x64xf32>
    %32 = arith.cmpf ogt, %30, %31 : vector<64x64xf32>
    %cst_29 = arith.constant 2.000000e-01 : f32
    %33 = vector.broadcast %cst_29 : f32 to vector<64x64xf32>
    %34 = arith.mulf %33, %30 : vector<64x64xf32>
    %35 = arith.select %32, %30, %34 : vector<64x64xi1>, vector<64x64xf32>
    %c0_30 = arith.constant 0 : index
    %c0_31 = arith.constant 0 : index
    %36 = vector.load %arg8[%c0_30, %c0_31] : memref<64x64xf32, #tpu.memory_space<vmem>>, vector<64x64xf32>
    %cst_32 = arith.constant 0.000000e+00 : f32
    %37 = vector.broadcast %cst_32 : f32 to vector<64x64xf32>
    %38 = arith.cmpf ogt, %36, %37 : vector<64x64xf32>
    %cst_33 = arith.constant -1.000000e+30 : f32
    %39 = vector.broadcast %cst_33 : f32 to vector<64x64xf32>
    %40 = arith.select %38, %35, %39 : vector<64x64xi1>, vector<64x64xf32>
    %cst_34 = arith.constant dense<0xFF800000> : vector<64xf32>
    %41 = vector.multi_reduction <maximumf>, %40, %cst_34 [1] : vector<64x64xf32> to vector<64xf32>
    %42 = vector.shape_cast %41 : vector<64xf32> to vector<64x1xf32>
    %43 = vector.broadcast %42 : vector<64x1xf32> to vector<64x64xf32>
    %44 = arith.subf %40, %43 : vector<64x64xf32>
    %45 = math.exp %44 : vector<64x64xf32>
    %cst_35 = arith.constant 0.000000e+00 : f32
    %46 = vector.broadcast %cst_35 : f32 to vector<64x64xf32>
    %47 = arith.select %38, %45, %46 : vector<64x64xi1>, vector<64x64xf32>
    %cst_36 = arith.constant dense<0.000000e+00> : vector<64xf32>
    %48 = vector.multi_reduction <add>, %47, %cst_36 [1] : vector<64x64xf32> to vector<64xf32>
    %49 = vector.shape_cast %48 : vector<64xf32> to vector<64x1xf32>
    %cst_37 = arith.constant 9.99999971E-10 : f32
    %50 = vector.broadcast %cst_37 : f32 to vector<64x1xf32>
    %51 = arith.addf %49, %50 : vector<64x1xf32>
    %52 = vector.broadcast %51 : vector<64x1xf32> to vector<64x64xf32>
    %53 = arith.divf %47, %52 : vector<64x64xf32>
    %cst_38 = arith.constant dense<0.000000e+00> : vector<64x1024xf32>
    %54 = tpu.matmul %53, %22, %cst_38 {dimension_numbers = #tpu.dot_dimension_numbers<[1], [0], [0], [1], [0, 0, 1, 1], [], []>} : vector<64x64xf32>, vector<64x1024xf32>, vector<64x1024xf32> -> vector<64x1024xf32>
    %cst_39 = arith.constant 0.000000e+00 : f32
    %55 = vector.broadcast %cst_39 : f32 to vector<64x1024xf32>
    %56 = arith.cmpf ogt, %54, %55 : vector<64x1024xf32>
    %cst_40 = arith.constant 0.000000e+00 : f32
    %57 = vector.broadcast %cst_40 : f32 to vector<64x1024xf32>
    %58 = arith.minimumf %54, %57 : vector<64x1024xf32>
    %59 = math.exp %58 : vector<64x1024xf32>
    %cst_41 = arith.constant 1.000000e+00 : f32
    %60 = vector.broadcast %cst_41 : f32 to vector<64x1024xf32>
    %61 = arith.subf %59, %60 : vector<64x1024xf32>
    %62 = arith.select %56, %54, %61 : vector<64x1024xi1>, vector<64x1024xf32>
    %c0_42 = arith.constant 0 : index
    %c0_43 = arith.constant 0 : index
    %63 = vector.load %arg12[%c0_42, %c0_43] : memref<8x64xf32, #tpu.memory_space<vmem>>, vector<8x64xf32>
    %cst_44 = arith.constant dense<0.000000e+00> : vector<8x1024xf32>
    %64 = tpu.matmul %63, %62, %cst_44 {dimension_numbers = #tpu.dot_dimension_numbers<[1], [0], [0], [1], [0, 0, 1, 1], [], []>} : vector<8x64xf32>, vector<64x1024xf32>, vector<8x1024xf32> -> vector<8x1024xf32>
    %c0_45 = arith.constant 0 : index
    %c0_46 = arith.constant 0 : index
    %65 = vector.load %arg13[%c0_45, %c0_46] : memref<1024x32xf32, #tpu.memory_space<vmem>>, vector<1024x32xf32>
    %cst_47 = arith.constant dense<0.000000e+00> : vector<8x32xf32>
    %66 = tpu.matmul %64, %65, %cst_47 {dimension_numbers = #tpu.dot_dimension_numbers<[1], [0], [0], [1], [0, 0, 1, 1], [], []>} : vector<8x1024xf32>, vector<1024x32xf32>, vector<8x32xf32> -> vector<8x32xf32>
    %c0_48 = arith.constant 0 : index
    %c0_49 = arith.constant 0 : index
    %67 = vector.load %arg14[%c0_48, %c0_49] : memref<1x32xf32, #tpu.memory_space<vmem>>, vector<1x32xf32>
    %68 = vector.broadcast %67 : vector<1x32xf32> to vector<8x32xf32>
    %69 = arith.addf %66, %68 : vector<8x32xf32>
    %70 = tpu.concatenate %19, %69 in 1 : vector<8x32xf32>, vector<8x32xf32> -> vector<8x64xf32>
    %c0_50 = arith.constant 0 : index
    %c0_51 = arith.constant 0 : index
    %71 = vector.load %arg15[%c0_50, %c0_51] : memref<8x64xf32, #tpu.memory_space<vmem>>, vector<8x64xf32>
    tpu.vector_store %arg15[%c0_50, %c0_51], %70 {strides = array<i32>} : memref<8x64xf32, #tpu.memory_space<vmem>>, vector<8x64xf32>,
    return
  }
}

</mosaic_0001>

<llo_original>
// kernel: mfu_forward.1
$region0: #{mfu_forward.1}
  #allocation0 [shape = 'u32[]', space=smem, size = 0x4, offset = 0x4, fixed_abs, tag = 'smem constant byte address 0x4 - core index']
  #allocation1 [shape = 'u32[72,128]{1,0:T(1,128)}', space=vmem, size = 0x9000, scoped, tag = 'internal scratch']
  %s0 = inlined_call_operand.vmem [shape: f32[8,64], index: 0, kind: input, shape index: {}]
  %s1 = inlined_call_operand.vmem [shape: f32[64,64], index: 1, kind: input, shape index: {}]
  %s2 = inlined_call_operand.vmem [shape: f32[1,64], index: 2, kind: input, shape index: {}]
  %s3 = inlined_call_operand.vmem [shape: f32[64,64], index: 3, kind: input, shape index: {}]
  %s4 = inlined_call_operand.vmem [shape: f32[1,64], index: 4, kind: input, shape index: {}]
  %s5 = inlined_call_operand.vmem [shape: f32[64,32], index: 5, kind: input, shape index: {}]
  %s6 = inlined_call_operand.vmem [shape: f32[1,32], index: 6, kind: input, shape index: {}]
  %s7 = inlined_call_operand.vmem [shape: f32[64,32], index: 7, kind: input, shape index: {}]
  %s8 = inlined_call_operand.vmem [shape: f32[64,64], index: 8, kind: input, shape index: {}]
  %s9 = inlined_call_operand.vmem [shape: f32[32,1], index: 9, kind: input, shape index: {}]
  %s10 = inlined_call_operand.vmem [shape: f32[32,1], index: 10, kind: input, shape index: {}]
  %s11 = inlined_call_operand.vmem [shape: f32[32,1024], index: 11, kind: input, shape index: {}]
  %s12 = inlined_call_operand.vmem [shape: f32[8,64], index: 12, kind: input, shape index: {}]
  %s13 = inlined_call_operand.vmem [shape: f32[1024,32], index: 13, kind: input, shape index: {}]
  %s14 = inlined_call_operand.vmem [shape: f32[1,32], index: 14, kind: input, shape index: {}]
  %s15 = inlined_call_operand.hbm [shape: f32[8,64], index: 15, kind: output, shape index: {}]
  %s16 = sld [smem:[#allocation0]]
  $region70: #{mfu_forward.1} parent=0
    _
  %s18 = ssub.s32 1, %s16
  %s19 = scalar_select 0, %s18, %s16
  $region1: #{mfu_forward.1} parent=0
    #allocation2 [shape = 'u8[4096]{0}', space=vmem, size = 0x1000, scoped, tag = 'output window, operand 0, single buffered']
    #allocation3 [shape = 's32[1]{0}', space=sflag, size = 0x4, scoped, tag = 'scoped memory for mfu_forward.1']
    %20 = vsyncpa [#allocation3], 0
    // Predicated region
    $region2: #{mfu_forward.1} parent=1 // pred_check
      _
    $region3: #{mfu_forward.1} parent=1 // pred_check_branch
      %22 = sbr.rel (0) target = $region5
    $region4: #{mfu_forward.1} parent=1 // pred_region
      _
    $region5: #{mfu_forward.1} parent=1 // pred_fallthru
      _
    // Predicated region
    $region6: #{mfu_forward.1} parent=1 // pred_check
      _
    $region7: #{mfu_forward.1} parent=1 // pred_check_branch
      %24 = sbr.rel (0) target = $region9
    $region8: #{mfu_forward.1} parent=1 // pred_region
      _
    $region9: #{mfu_forward.1} parent=1 // pred_fallthru
      _
    // Predicated region
    $region10: #{mfu_forward.1} parent=1 // pred_check
      _
    $region11: #{mfu_forward.1} parent=1 // pred_check_branch
      %26 = sbr.rel (0) target = $region13
    $region12: #{mfu_forward.1} parent=1 // pred_region
      _
    $region13: #{mfu_forward.1} parent=1 // pred_fallthru
      _
    // Predicated region
    $region14: #{mfu_forward.1} parent=1 // pred_check
      _
    $region15: #{mfu_forward.1} parent=1 // pred_check_branch
      %28 = sbr.rel (0) target = $region17
    $region16: #{mfu_forward.1} parent=1 // pred_region
      _
    $region17: #{mfu_forward.1} parent=1 // pred_fallthru
      _
    // Predicated region
    $region18: #{mfu_forward.1} parent=1 // pred_check
      _
    $region19: #{mfu_forward.1} parent=1 // pred_check_branch
      %30 = sbr.rel (0) target = $region21
    $region20: #{mfu_forward.1} parent=1 // pred_region
      _
    $region21: #{mfu_forward.1} parent=1 // pred_fallthru
      _
    // Predicated region
    $region22: #{mfu_forward.1} parent=1 // pred_check
      _
    $region23: #{mfu_forward.1} parent=1 // pred_check_branch
      %32 = sbr.rel (0) target = $region25
    $region24: #{mfu_forward.1} parent=1 // pred_region
      _
    $region25: #{mfu_forward.1} parent=1 // pred_fallthru
      _
    // Predicated region
    $region26: #{mfu_forward.1} parent=1 // pred_check
      _
    $region27: #{mfu_forward.1} parent=1 // pred_check_branch
      %34 = sbr.rel (0) target = $region29
    $region28: #{mfu_forward.1} parent=1 // pred_region
      _
    $region29: #{mfu_forward.1} parent=1 // pred_fallthru
      _
    // Predicated region
    $region30: #{mfu_forward.1} parent=1 // pred_check
      _
    $region31: #{mfu_forward.1} parent=1 // pred_check_branch
      %36 = sbr.rel (0) target = $region33
    $region32: #{mfu_forward.1} parent=1 // pred_region
      _
    $region33: #{mfu_forward.1} parent=1 // pred_fallthru
      _
    // Predicated region
    $region34: #{mfu_forward.1} parent=1 // pred_check
      _
    $region35: #{mfu_forward.1} parent=1 // pred_check_branch
      %38 = sbr.rel (0) target = $region37
    $region36: #{mfu_forward.1} parent=1 // pred_region
      _
    $region37: #{mfu_forward.1} parent=1 // pred_fallthru
      _
    // Predicated region
    $region38: #{mfu_forward.1} parent=1 // pred_check
      _
    $region39: #{mfu_forward.1} parent=1 // pred_check_branch
      %40 = sbr.rel (0) target = $region41
    $region40: #{mfu_forward.1} parent=1 // pred_region
      _
    $region41: #{mfu_forward.1} parent=1 // pred_fallthru
      _
    // Predicated region
    $region42: #{mfu_forward.1} parent=1 // pred_check
      _
    $region43: #{mfu_forward.1} parent=1 // pred_check_branch
      %42 = sbr.rel (0) target = $region45
    $region44: #{mfu_forward.1} parent=1 // pred_region
      _
    $region45: #{mfu_forward.1} parent=1 // pred_fallthru
      _
    // Predicated region
    $region46: #{mfu_forward.1} parent=1 // pred_check
      _
    $region47: #{mfu_forward.1} parent=1 // pred_check_branch
      %44 = sbr.rel (0) target = $region49
    $region48: #{mfu_forward.1} parent=1 // pred_region
      _
    $region49: #{mfu_forward.1} parent=1 // pred_fallthru
      _
    // Predicated region
    $region50: #{mfu_forward.1} parent=1 // pred_check
      _
    $region51: #{mfu_forward.1} parent=1 // pred_check_branch
      %46 = sbr.rel (0) target = $region53
    $region52: #{mfu_forward.1} parent=1 // pred_region
      _
    $region53: #{mfu_forward.1} parent=1 // pred_fallthru
      _
    // Predicated region
    $region54: #{mfu_forward.1} parent=1 // pred_check
      _
    $region55: #{mfu_forward.1} parent=1 // pred_check_branch
      %48 = sbr.rel (0) target = $region57
    $region56: #{mfu_forward.1} parent=1 // pred_region
      _
    $region57: #{mfu_forward.1} parent=1 // pred_fallthru
      _
    // Predicated region
    $region58: #{mfu_forward.1} parent=1 // pred_check
      _
    $region59: #{mfu_forward.1} parent=1 // pred_check_branch
      %50 = sbr.rel (0) target = $region61
    $region60: #{mfu_forward.1} parent=1 // pred_region
      _
    $region61: #{mfu_forward.1} parent=1 // pred_fallthru
      _
    %v51 = vld [vmem:[%s0] sm:$0xff]
    %v52 = vld [vmem:[%s1] sm:$0xff]
    %v53 = vld [vmem:[%s1 + $0x8] sm:$0xff]
    %v54 = vld [vmem:[%s1 + $0x10] sm:$0xff]
    %v55 = vld [vmem:[%s1 + $0x18] sm:$0xff]
    %v56 = vld [vmem:[%s1 + $0x20] sm:$0xff]
    %v57 = vld [vmem:[%s1 + $0x28] sm:$0xff]
    %v58 = vld [vmem:[%s1 + $0x30] sm:$0xff]
    %v59 = vld [vmem:[%s1 + $0x38] sm:$0xff]
    %v60 = vld [vmem:[%s2] sm:$0x1]
    %v62 = vperm.slane %v60, 0
    %vm64 = vcmask 523264
    %v66 = vsel %vm64, %v51, 0
    %68 = vmatpush.msra.mxu0 0.0
    %69 = vmatpush.msra.mxu0 0.0
    %70 = vmatpush.msra.mxu0 0.0
    %71 = vmatpush.msra.mxu0 0.0
    %72 = vmatpush.msra.mxu0 0.0
    %73 = vmatpush.msra.mxu0 0.0
    %74 = vmatpush.msra.mxu0 0.0
    %75 = vmatpush.msra.mxu0 0.0
    %76 = vmatpush.msra.mxu0 %v59
    %77 = vmatpush.msra.mxu0 %v58
    %78 = vmatpush.msra.mxu0 %v57
    %79 = vmatpush.msra.mxu0 %v56
    %80 = vmatpush.msra.mxu0 %v55
    %81 = vmatpush.msra.mxu0 %v54
    %82 = vmatpush.msra.mxu0 %v53
    %83 = vmatpush.msra.mxu0 %v52
    %84 = vmatmul.f32.gmra.mxu0 %v66
    %v85 = vpop.f32.mrf.mxu0
    %v86 = vadd.f32 %v62, %v85
    %87 = vdwg.mxu0
    %v88 = vmax.f32 %v86, 0.0
    %v89 = vld [vmem:[%s3] sm:$0xff]
    %v90 = vld [vmem:[%s3 + $0x8] sm:$0xff]
    %v91 = vld [vmem:[%s3 + $0x10] sm:$0xff]
    %v92 = vld [vmem:[%s3 + $0x18] sm:$0xff]
    %v93 = vld [vmem:[%s3 + $0x20] sm:$0xff]
    %v94 = vld [vmem:[%s3 + $0x28] sm:$0xff]
    %v95 = vld [vmem:[%s3 + $0x30] sm:$0xff]
    %v96 = vld [vmem:[%s3 + $0x38] sm:$0xff]
    %v97 = vld [vmem:[%s4] sm:$0x1]
    %v99 = vperm.slane %v97, 0
    %v102 = vsel %vm64, %v88, 0
    %104 = vmatpush.msra.mxu0 0.0
    %105 = vmatpush.msra.mxu0 0.0
    %106 = vmatpush.msra.mxu0 0.0
    %107 = vmatpush.msra.mxu0 0.0
    %108 = vmatpush.msra.mxu0 0.0
    %109 = vmatpush.msra.mxu0 0.0
    %110 = vmatpush.msra.mxu0 0.0
    %111 = vmatpush.msra.mxu0 0.0
    %112 = vmatpush.msra.mxu0 %v96
    %113 = vmatpush.msra.mxu0 %v95
    %114 = vmatpush.msra.mxu0 %v94
    %115 = vmatpush.msra.mxu0 %v93
    %116 = vmatpush.msra.mxu0 %v92
    %117 = vmatpush.msra.mxu0 %v91
    %118 = vmatpush.msra.mxu0 %v90
    %119 = vmatpush.msra.mxu0 %v89
    %120 = vmatmul.f32.gmra.mxu0 %v102
    %v121 = vpop.f32.mrf.mxu0
    %v122 = vadd.f32 %v99, %v121
    %123 = vdwg.mxu0
    %v124 = vmax.f32 %v122, 0.0
    %v125 = vld [vmem:[%s5] sm:$0xff]
    %v126 = vld [vmem:[%s5 + $0x8] sm:$0xff]
    %v127 = vld [vmem:[%s5 + $0x10] sm:$0xff]
    %v128 = vld [vmem:[%s5 + $0x18] sm:$0xff]
    %v129 = vld [vmem:[%s5 + $0x20] sm:$0xff]
    %v130 = vld [vmem:[%s5 + $0x28] sm:$0xff]
    %v131 = vld [vmem:[%s5 + $0x30] sm:$0xff]
    %v132 = vld [vmem:[%s5 + $0x38] sm:$0xff]
    %v133 = vld [vmem:[%s6] sm:$0x1]
    %v135 = vperm.slane %v133, 0
    %v138 = vsel %vm64, %v124, 0
    %140 = vmatpush.msra.mxu0 0.0
    %141 = vmatpush.msra.mxu0 0.0
    %142 = vmatpush.msra.mxu0 0.0
    %143 = vmatpush.msra.mxu0 0.0
    %144 = vmatpush.msra.mxu0 0.0
    %145 = vmatpush.msra.mxu0 0.0
    %146 = vmatpush.msra.mxu0 0.0
    %147 = vmatpush.msra.mxu0 0.0
    %148 = vmatpush.msra.mxu0 %v132
    %149 = vmatpush.msra.mxu0 %v131
    %150 = vmatpush.msra.mxu0 %v130
    %151 = vmatpush.msra.mxu0 %v129
    %152 = vmatpush.msra.mxu0 %v128
    %153 = vmatpush.msra.mxu0 %v127
    %154 = vmatpush.msra.mxu0 %v126
    %155 = vmatpush.msra.mxu0 %v125
    %156 = vmatmul.f32.gmra.mxu0 %v138
    %v157 = vpop.f32.mrf.mxu0
    %v158 = vadd.f32 %v135, %v157
    %159 = vdwg.mxu0
    %v160 = vld [vmem:[%s7] sm:$0xff]
    %v161 = vld [vmem:[%s7 + $0x8] sm:$0xff]
    %v162 = vld [vmem:[%s7 + $0x10] sm:$0xff]
    %v163 = vld [vmem:[%s7 + $0x18] sm:$0xff]
    %v164 = vld [vmem:[%s7 + $0x20] sm:$0xff]
    %v165 = vld [vmem:[%s7 + $0x28] sm:$0xff]
    %v166 = vld [vmem:[%s7 + $0x30] sm:$0xff]
    %v167 = vld [vmem:[%s7 + $0x38] sm:$0xff]
    %v168 = vld [vmem:[%s11] sm:$0xff]
    %v169 = vld [vmem:[%s11 + $0x8] sm:$0xff]
    %v170 = vld [vmem:[%s11 + $0x10] sm:$0xff]
    %v171 = vld [vmem:[%s11 + $0x18] sm:$0xff]
    %v172 = vld [vmem:[%s11 + $0x20] sm:$0xff]
    %v173 = vld [vmem:[%s11 + $0x28] sm:$0xff]
    %v174 = vld [vmem:[%s11 + $0x30] sm:$0xff]
    %v175 = vld [vmem:[%s11 + $0x38] sm:$0xff]
    %v176 = vld [vmem:[%s11 + $0x40] sm:$0xff]
    %v177 = vld [vmem:[%s11 + $0x48] sm:$0xff]
    %v178 = vld [vmem:[%s11 + $0x50] sm:$0xff]
    %v179 = vld [vmem:[%s11 + $0x58] sm:$0xff]
    %v180 = vld [vmem:[%s11 + $0x60] sm:$0xff]
    %v181 = vld [vmem:[%s11 + $0x68] sm:$0xff]
    %v182 = vld [vmem:[%s11 + $0x70] sm:$0xff]
    %v183 = vld [vmem:[%s11 + $0x78] sm:$0xff]
    %v184 = vld [vmem:[%s11 + $0x80] sm:$0xff]
    %v185 = vld [vmem:[%s11 + $0x88] sm:$0xff]
    %v186 = vld [vmem:[%s11 + $0x90] sm:$0xff]
    %v187 = vld [vmem:[%s11 + $0x98] sm:$0xff]
    %v188 = vld [vmem:[%s11 + $0xa0] sm:$0xff]
    %v189 = vld [vmem:[%s11 + $0xa8] sm:$0xff]
    %v190 = vld [vmem:[%s11 + $0xb0] sm:$0xff]
    %v191 = vld [vmem:[%s11 + $0xb8] sm:$0xff]
    %v192 = vld [vmem:[%s11 + $0xc0] sm:$0xff]
    %v193 = vld [vmem:[%s11 + $0xc8] sm:$0xff]
    %v194 = vld [vmem:[%s11 + $0xd0] sm:$0xff]
    %v195 = vld [vmem:[%s11 + $0xd8] sm:$0xff]
    %v196 = vld [vmem:[%s11 + $0xe0] sm:$0xff]
    %v197 = vld [vmem:[%s11 + $0xe8] sm:$0xff]
    %v198 = vld [vmem:[%s11 + $0xf0] sm:$0xff]
    %v199 = vld [vmem:[%s11 + $0xf8] sm:$0xff]
    %vm200 = vcmask 261120
    %v202 = vsel %vm200, %v160, 0
    %v205 = vsel %vm200, %v161, 0
    %v208 = vsel %vm200, %v162, 0
    %v211 = vsel %vm200, %v163, 0
    %v214 = vsel %vm200, %v164, 0
    %v217 = vsel %vm200, %v165, 0
    %v220 = vsel %vm200, %v166, 0
    %v223 = vsel %vm200, %v167, 0
    %225 = vmatpush.msra.mxu0 0.0
    %226 = vmatpush.msra.mxu0 0.0
    %227 = vmatpush.msra.mxu0 0.0
    %228 = vmatpush.msra.mxu0 0.0
    %229 = vmatpush.msra.mxu0 0.0
    %230 = vmatpush.msra.mxu0 0.0
    %231 = vmatpush.msra.mxu0 0.0
    %232 = vmatpush.msra.mxu0 0.0
    %233 = vmatpush.msra.mxu0 0.0
    %234 = vmatpush.msra.mxu0 0.0
    %235 = vmatpush.msra.mxu0 0.0
    %236 = vmatpush.msra.mxu0 0.0
    %237 = vmatpush.msra.mxu0 %v192
    %238 = vmatpush.msra.mxu0 %v184
    %239 = vmatpush.msra.mxu0 %v176
    %240 = vmatpush.msra.mxu0 %v168
    %241 = vmatmul.f32.gmra.mxu0 %v202
    %v242 = vpop.f32.mrf.mxu0
    %v243 = vadd.f32 0.0, %v242
    %244 = vmatmul.f32.gmra.mxu0 %v205
    %v245 = vpop.f32.mrf.mxu0
    %v246 = vadd.f32 0.0, %v245
    %247 = vmatmul.f32.gmra.mxu0 %v208
    %v248 = vpop.f32.mrf.mxu0
    %v249 = vadd.f32 0.0, %v248
    %250 = vmatmul.f32.gmra.mxu0 %v211
    %v251 = vpop.f32.mrf.mxu0
    %v252 = vadd.f32 0.0, %v251
    %253 = vmatmul.f32.gmra.mxu0 %v214
    %v254 = vpop.f32.mrf.mxu0
    %v255 = vadd.f32 0.0, %v254
    %256 = vmatmul.f32.gmra.mxu0 %v217
    %v257 = vpop.f32.mrf.mxu0
    %v258 = vadd.f32 0.0, %v257
    %259 = vmatmul.f32.gmra.mxu0 %v220
    %v260 = vpop.f32.mrf.mxu0
    %v261 = vadd.f32 0.0, %v260
    %262 = vmatmul.f32.gmra.mxu0 %v223
    %v263 = vpop.f32.mrf.mxu0
    %v264 = vadd.f32 0.0, %v263
    %265 = vdwg.mxu0
    %266 = vmatpush.msra.mxu0 0.0
    %267 = vmatpush.msra.mxu0 0.0
    %268 = vmatpush.msra.mxu0 0.0
    %269 = vmatpush.msra.mxu0 0.0
    %270 = vmatpush.msra.mxu0 0.0
    %271 = vmatpush.msra.mxu0 0.0
    %272 = vmatpush.msra.mxu0 0.0
    %273 = vmatpush.msra.mxu0 0.0
    %274 = vmatpush.msra.mxu0 0.0
    %275 = vmatpush.msra.mxu0 0.0
    %276 = vmatpush.msra.mxu0 0.0
    %277 = vmatpush.msra.mxu0 0.0
    %278 = vmatpush.msra.mxu0 %v193
    %279 = vmatpush.msra.mxu0 %v185
    %280 = vmatpush.msra.mxu0 %v177
    %281 = vmatpush.msra.mxu0 %v169
    %282 = vmatmul.f32.gmra.mxu0 %v202
    %v283 = vpop.f32.mrf.mxu0
    %v284 = vadd.f32 0.0, %v283
    %285 = vmatmul.f32.gmra.mxu0 %v205
    %v286 = vpop.f32.mrf.mxu0
    %v287 = vadd.f32 0.0, %v286
    %288 = vmatmul.f32.gmra.mxu0 %v208
    %v289 = vpop.f32.mrf.mxu0
    %v290 = vadd.f32 0.0, %v289
    %291 = vmatmul.f32.gmra.mxu0 %v211
    %v292 = vpop.f32.mrf.mxu0
    %v293 = vadd.f32 0.0, %v292
    %294 = vmatmul.f32.gmra.mxu0 %v214
    %v295 = vpop.f32.mrf.mxu0
    %v296 = vadd.f32 0.0, %v295
    %297 = vmatmul.f32.gmra.mxu0 %v217
    %v298 = vpop.f32.mrf.mxu0
    %v299 = vadd.f32 0.0, %v298
    %300 = vmatmul.f32.gmra.mxu0 %v220
    %v301 = vpop.f32.mrf.mxu0
    %v302 = vadd.f32 0.0, %v301
    %303 = vmatmul.f32.gmra.mxu0 %v223
    %v304 = vpop.f32.mrf.mxu0
    %v305 = vadd.f32 0.0, %v304
    %306 = vdwg.mxu0
    %307 = vmatpush.msra.mxu0 0.0
    %308 = vmatpush.msra.mxu0 0.0
    %309 = vmatpush.msra.mxu0 0.0
    %310 = vmatpush.msra.mxu0 0.0
    %311 = vmatpush.msra.mxu0 0.0
    %312 = vmatpush.msra.mxu0 0.0
    %313 = vmatpush.msra.mxu0 0.0
    %314 = vmatpush.msra.mxu0 0.0
    %315 = vmatpush.msra.mxu0 0.0
    %316 = vmatpush.msra.mxu0 0.0
    %317 = vmatpush.msra.mxu0 0.0
    %318 = vmatpush.msra.mxu0 0.0
    %319 = vmatpush.msra.mxu0 %v194
    %320 = vmatpush.msra.mxu0 %v186
    %321 = vmatpush.msra.mxu0 %v178
    %322 = vmatpush.msra.mxu0 %v170
    %323 = vmatmul.f32.gmra.mxu0 %v202
    %v324 = vpop.f32.mrf.mxu0
    %v325 = vadd.f32 0.0, %v324
    %326 = vmatmul.f32.gmra.mxu0 %v205
    %v327 = vpop.f32.mrf.mxu0
    %v328 = vadd.f32 0.0, %v327
    %329 = vmatmul.f32.gmra.mxu0 %v208
    %v330 = vpop.f32.mrf.mxu0
    %v331 = vadd.f32 0.0, %v330
    %332 = vmatmul.f32.gmra.mxu0 %v211
    %v333 = vpop.f32.mrf.mxu0
    %v334 = vadd.f32 0.0, %v333
    %335 = vmatmul.f32.gmra.mxu0 %v214
    %v336 = vpop.f32.mrf.mxu0
    %v337 = vadd.f32 0.0, %v336
    %338 = vmatmul.f32.gmra.mxu0 %v217
    %v339 = vpop.f32.mrf.mxu0
    %v340 = vadd.f32 0.0, %v339
    %341 = vmatmul.f32.gmra.mxu0 %v220
    %v342 = vpop.f32.mrf.mxu0
    %v343 = vadd.f32 0.0, %v342
    %344 = vmatmul.f32.gmra.mxu0 %v223
    %v345 = vpop.f32.mrf.mxu0
    %v346 = vadd.f32 0.0, %v345
    %347 = vdwg.mxu0
    %348 = vmatpush.msra.mxu0 0.0
    %349 = vmatpush.msra.mxu0 0.0
    %350 = vmatpush.msra.mxu0 0.0
    %351 = vmatpush.msra.mxu0 0.0
    %352 = vmatpush.msra.mxu0 0.0
    %353 = vmatpush.msra.mxu0 0.0
    %354 = vmatpush.msra.mxu0 0.0
    %355 = vmatpush.msra.mxu0 0.0
    %356 = vmatpush.msra.mxu0 0.0
    %357 = vmatpush.msra.mxu0 0.0
    %358 = vmatpush.msra.mxu0 0.0
    %359 = vmatpush.msra.mxu0 0.0
    %360 = vmatpush.msra.mxu0 %v195
    %361 = vmatpush.msra.mxu0 %v187
    %362 = vmatpush.msra.mxu0 %v179
    %363 = vmatpush.msra.mxu0 %v171
    %364 = vmatmul.f32.gmra.mxu0 %v202
    %v365 = vpop.f32.mrf.mxu0
    %v366 = vadd.f32 0.0, %v365
    %367 = vmatmul.f32.gmra.mxu0 %v205
    %v368 = vpop.f32.mrf.mxu0
    %v369 = vadd.f32 0.0, %v368
    %370 = vmatmul.f32.gmra.mxu0 %v208
    %v371 = vpop.f32.mrf.mxu0
    %v372 = vadd.f32 0.0, %v371
    %373 = vmatmul.f32.gmra.mxu0 %v211
    %v374 = vpop.f32.mrf.mxu0
    %v375 = vadd.f32 0.0, %v374
    %376 = vmatmul.f32.gmra.mxu0 %v214
    %v377 = vpop.f32.mrf.mxu0
    %v378 = vadd.f32 0.0, %v377
    %379 = vmatmul.f32.gmra.mxu0 %v217
    %v380 = vpop.f32.mrf.mxu0
    %v381 = vadd.f32 0.0, %v380
    %382 = vmatmul.f32.gmra.mxu0 %v220
    %v383 = vpop.f32.mrf.mxu0
    %v384 = vadd.f32 0.0, %v383
    %385 = vmatmul.f32.gmra.mxu0 %v223
    %v386 = vpop.f32.mrf.mxu0
    %v387 = vadd.f32 0.0, %v386
    %388 = vdwg.mxu0
    %389 = vmatpush.msra.mxu0 0.0
    %390 = vmatpush.msra.mxu0 0.0
    %391 = vmatpush.msra.mxu0 0.0
    %392 = vmatpush.msra.mxu0 0.0
    %393 = vmatpush.msra.mxu0 0.0
    %394 = vmatpush.msra.mxu0 0.0
    %395 = vmatpush.msra.mxu0 0.0
    %396 = vmatpush.msra.mxu0 0.0
    %397 = vmatpush.msra.mxu0 0.0
    %398 = vmatpush.msra.mxu0 0.0
    %399 = vmatpush.msra.mxu0 0.0
    %400 = vmatpush.msra.mxu0 0.0
    %401 = vmatpush.msra.mxu0 %v196
    %402 = vmatpush.msra.mxu0 %v188
    %403 = vmatpush.msra.mxu0 %v180
    %404 = vmatpush.msra.mxu0 %v172
    %405 = vmatmul.f32.gmra.mxu0 %v202
    %v406 = vpop.f32.mrf.mxu0
    %v407 = vadd.f32 0.0, %v406
    %408 = vmatmul.f32.gmra.mxu0 %v205
    %v409 = vpop.f32.mrf.mxu0
    %v410 = vadd.f32 0.0, %v409
    %411 = vmatmul.f32.gmra.mxu0 %v208
    %v412 = vpop.f32.mrf.mxu0
    %v413 = vadd.f32 0.0, %v412
    %414 = vmatmul.f32.gmra.mxu0 %v211
    %v415 = vpop.f32.mrf.mxu0
    %v416 = vadd.f32 0.0, %v415
    %417 = vmatmul.f32.gmra.mxu0 %v214
    %v418 = vpop.f32.mrf.mxu0
    %v419 = vadd.f32 0.0, %v418
    %420 = vmatmul.f32.gmra.mxu0 %v217
    %v421 = vpop.f32.mrf.mxu0
    %v422 = vadd.f32 0.0, %v421
    %423 = vmatmul.f32.gmra.mxu0 %v220
    %v424 = vpop.f32.mrf.mxu0
    %v425 = vadd.f32 0.0, %v424
    %426 = vmatmul.f32.gmra.mxu0 %v223
    %v427 = vpop.f32.mrf.mxu0
    %v428 = vadd.f32 0.0, %v427
    %429 = vdwg.mxu0
    %430 = vmatpush.msra.mxu0 0.0
    %431 = vmatpush.msra.mxu0 0.0
    %432 = vmatpush.msra.mxu0 0.0
    %433 = vmatpush.msra.mxu0 0.0
    %434 = vmatpush.msra.mxu0 0.0
    %435 = vmatpush.msra.mxu0 0.0
    %436 = vmatpush.msra.mxu0 0.0
    %437 = vmatpush.msra.mxu0 0.0
    %438 = vmatpush.msra.mxu0 0.0
    %439 = vmatpush.msra.mxu0 0.0
    %440 = vmatpush.msra.mxu0 0.0
    %441 = vmatpush.msra.mxu0 0.0
    %442 = vmatpush.msra.mxu0 %v197
    %443 = vmatpush.msra.mxu0 %v189
    %444 = vmatpush.msra.mxu0 %v181
    %445 = vmatpush.msra.mxu0 %v173
    %446 = vmatmul.f32.gmra.mxu0 %v202
    %v447 = vpop.f32.mrf.mxu0
    %v448 = vadd.f32 0.0, %v447
    %449 = vmatmul.f32.gmra.mxu0 %v205
    %v450 = vpop.f32.mrf.mxu0
    %v451 = vadd.f32 0.0, %v450
    %452 = vmatmul.f32.gmra.mxu0 %v208
    %v453 = vpop.f32.mrf.mxu0
    %v454 = vadd.f32 0.0, %v453
    %455 = vmatmul.f32.gmra.mxu0 %v211
    %v456 = vpop.f32.mrf.mxu0
    %v457 = vadd.f32 0.0, %v456
    %458 = vmatmul.f32.gmra.mxu0 %v214
    %v459 = vpop.f32.mrf.mxu0
    %v460 = vadd.f32 0.0, %v459
    %461 = vmatmul.f32.gmra.mxu0 %v217
    %v462 = vpop.f32.mrf.mxu0
    %v463 = vadd.f32 0.0, %v462
    %464 = vmatmul.f32.gmra.mxu0 %v220
    %v465 = vpop.f32.mrf.mxu0
    %v466 = vadd.f32 0.0, %v465
    %467 = vmatmul.f32.gmra.mxu0 %v223
    %v468 = vpop.f32.mrf.mxu0
    %v469 = vadd.f32 0.0, %v468
    %470 = vdwg.mxu0
    %471 = vmatpush.msra.mxu0 0.0
    %472 = vmatpush.msra.mxu0 0.0
    %473 = vmatpush.msra.mxu0 0.0
    %474 = vmatpush.msra.mxu0 0.0
    %475 = vmatpush.msra.mxu0 0.0
    %476 = vmatpush.msra.mxu0 0.0
    %477 = vmatpush.msra.mxu0 0.0
    %478 = vmatpush.msra.mxu0 0.0
    %479 = vmatpush.msra.mxu0 0.0
    %480 = vmatpush.msra.mxu0 0.0
    %481 = vmatpush.msra.mxu0 0.0
    %482 = vmatpush.msra.mxu0 0.0
    %483 = vmatpush.msra.mxu0 %v198
    %484 = vmatpush.msra.mxu0 %v190
    %485 = vmatpush.msra.mxu0 %v182
    %486 = vmatpush.msra.mxu0 %v174
    %487 = vmatmul.f32.gmra.mxu0 %v202
    %v488 = vpop.f32.mrf.mxu0
    %v489 = vadd.f32 0.0, %v488
    %490 = vmatmul.f32.gmra.mxu0 %v205
    %v491 = vpop.f32.mrf.mxu0
    %v492 = vadd.f32 0.0, %v491
    %493 = vmatmul.f32.gmra.mxu0 %v208
    %v494 = vpop.f32.mrf.mxu0
    %v495 = vadd.f32 0.0, %v494
    %496 = vmatmul.f32.gmra.mxu0 %v211
    %v497 = vpop.f32.mrf.mxu0
    %v498 = vadd.f32 0.0, %v497
    %499 = vmatmul.f32.gmra.mxu0 %v214
    %v500 = vpop.f32.mrf.mxu0
    %v501 = vadd.f32 0.0, %v500
    %502 = vmatmul.f32.gmra.mxu0 %v217
    %v503 = vpop.f32.mrf.mxu0
    %v504 = vadd.f32 0.0, %v503
    %505 = vmatmul.f32.gmra.mxu0 %v220
    %v506 = vpop.f32.mrf.mxu0
    %v507 = vadd.f32 0.0, %v506
    %508 = vmatmul.f32.gmra.mxu0 %v223
    %v509 = vpop.f32.mrf.mxu0
    %v510 = vadd.f32 0.0, %v509
    %511 = vdwg.mxu0
    %512 = vmatpush.msra.mxu0 0.0
    %513 = vmatpush.msra.mxu0 0.0
    %514 = vmatpush.msra.mxu0 0.0
    %515 = vmatpush.msra.mxu0 0.0
    %516 = vmatpush.msra.mxu0 0.0
    %517 = vmatpush.msra.mxu0 0.0
    %518 = vmatpush.msra.mxu0 0.0
    %519 = vmatpush.msra.mxu0 0.0
    %520 = vmatpush.msra.mxu0 0.0
    %521 = vmatpush.msra.mxu0 0.0
    %522 = vmatpush.msra.mxu0 0.0
    %523 = vmatpush.msra.mxu0 0.0
    %524 = vmatpush.msra.mxu0 %v199
    %525 = vmatpush.msra.mxu0 %v191
    %526 = vmatpush.msra.mxu0 %v183
    %527 = vmatpush.msra.mxu0 %v175
    %528 = vmatmul.f32.gmra.mxu0 %v202
    %v529 = vpop.f32.mrf.mxu0
    %v530 = vadd.f32 0.0, %v529
    %531 = vmatmul.f32.gmra.mxu0 %v205
    %v532 = vpop.f32.mrf.mxu0
    %v533 = vadd.f32 0.0, %v532
    %534 = vmatmul.f32.gmra.mxu0 %v208
    %v535 = vpop.f32.mrf.mxu0
    %v536 = vadd.f32 0.0, %v535
    %537 = vmatmul.f32.gmra.mxu0 %v211
    %v538 = vpop.f32.mrf.mxu0
    %v539 = vadd.f32 0.0, %v538
    %540 = vmatmul.f32.gmra.mxu0 %v214
    %v541 = vpop.f32.mrf.mxu0
    %v542 = vadd.f32 0.0, %v541
    %543 = vmatmul.f32.gmra.mxu0 %v217
    %v544 = vpop.f32.mrf.mxu0
    %v545 = vadd.f32 0.0, %v544
    %546 = vmatmul.f32.gmra.mxu0 %v220
    %v547 = vpop.f32.mrf.mxu0
    %v548 = vadd.f32 0.0, %v547
    %549 = vmatmul.f32.gmra.mxu0 %v223
    %v550 = vpop.f32.mrf.mxu0
    %v551 = vadd.f32 0.0, %v550
    %552 = vdwg.mxu0
    %v553 = vld [vmem:[%s9] sm:$0xff]
    %v554 = vld [vmem:[%s9 + $0x8] sm:$0xff]
    %v555 = vld [vmem:[%s9 + $0x10] sm:$0xff]
    %v556 = vld [vmem:[%s9 + $0x18] sm:$0xff]
    %557 = vmatpush.msra.mxu0 0.0
    %558 = vmatpush.msra.mxu0 0.0
    %559 = vmatpush.msra.mxu0 0.0
    %560 = vmatpush.msra.mxu0 0.0
    %561 = vmatpush.msra.mxu0 0.0
    %562 = vmatpush.msra.mxu0 0.0
    %563 = vmatpush.msra.mxu0 0.0
    %564 = vmatpush.msra.mxu0 0.0
    %565 = vmatpush.msra.mxu0 0.0
    %566 = vmatpush.msra.mxu0 0.0
    %567 = vmatpush.msra.mxu0 0.0
    %568 = vmatpush.msra.mxu0 0.0
    %569 = vmatpush.msra.mxu0 %v556
    %570 = vmatpush.msra.mxu0 %v555
    %571 = vmatpush.msra.mxu0 %v554
    %572 = vmatpush.msra.mxu0 %v553
    %573 = vmatmul.f32.gmra.mxu0 %v202
    %v574 = vpop.f32.mrf.mxu0
    %v575 = vadd.f32 0.0, %v574
    %576 = vmatmul.f32.gmra.mxu0 %v205
    %v577 = vpop.f32.mrf.mxu0
    %v578 = vadd.f32 0.0, %v577
    %579 = vmatmul.f32.gmra.mxu0 %v208
    %v580 = vpop.f32.mrf.mxu0
    %v581 = vadd.f32 0.0, %v580
    %582 = vmatmul.f32.gmra.mxu0 %v211
    %v583 = vpop.f32.mrf.mxu0
    %v584 = vadd.f32 0.0, %v583
    %585 = vmatmul.f32.gmra.mxu0 %v214
    %v586 = vpop.f32.mrf.mxu0
    %v587 = vadd.f32 0.0, %v586
    %588 = vmatmul.f32.gmra.mxu0 %v217
    %v589 = vpop.f32.mrf.mxu0
    %v590 = vadd.f32 0.0, %v589
    %591 = vmatmul.f32.gmra.mxu0 %v220
    %v592 = vpop.f32.mrf.mxu0
    %v593 = vadd.f32 0.0, %v592
    %594 = vmatmul.f32.gmra.mxu0 %v223
    %v595 = vpop.f32.mrf.mxu0
    %v596 = vadd.f32 0.0, %v595
    %597 = vdwg.mxu0
    %v598 = vld [vmem:[%s10] sm:$0xff]
    %v599 = vld [vmem:[%s10 + $0x8] sm:$0xff]
    %v600 = vld [vmem:[%s10 + $0x10] sm:$0xff]
    %v601 = vld [vmem:[%s10 + $0x18] sm:$0xff]
    %602 = vmatpush.msra.mxu0 0.0
    %603 = vmatpush.msra.mxu0 0.0
    %604 = vmatpush.msra.mxu0 0.0
    %605 = vmatpush.msra.mxu0 0.0
    %606 = vmatpush.msra.mxu0 0.0
    %607 = vmatpush.msra.mxu0 0.0
    %608 = vmatpush.msra.mxu0 0.0
    %609 = vmatpush.msra.mxu0 0.0
    %610 = vmatpush.msra.mxu0 0.0
    %611 = vmatpush.msra.mxu0 0.0
    %612 = vmatpush.msra.mxu0 0.0
    %613 = vmatpush.msra.mxu0 0.0
    %614 = vmatpush.msra.mxu0 %v601
    %615 = vmatpush.msra.mxu0 %v600
    %616 = vmatpush.msra.mxu0 %v599
    %617 = vmatpush.msra.mxu0 %v598
    %618 = vmatmul.f32.gmra.mxu0 %v202
    %v619 = vpop.f32.mrf.mxu0
    %v620 = vadd.f32 0.0, %v619
    %621 = vmatmul.f32.gmra.mxu0 %v205
    %v622 = vpop.f32.mrf.mxu0
    %v623 = vadd.f32 0.0, %v622
    %624 = vmatmul.f32.gmra.mxu0 %v208
    %v625 = vpop.f32.mrf.mxu0
    %v626 = vadd.f32 0.0, %v625
    %627 = vmatmul.f32.gmra.mxu0 %v211
    %v628 = vpop.f32.mrf.mxu0
    %v629 = vadd.f32 0.0, %v628
    %630 = vmatmul.f32.gmra.mxu0 %v214
    %v631 = vpop.f32.mrf.mxu0
    %v632 = vadd.f32 0.0, %v631
    %633 = vmatmul.f32.gmra.mxu0 %v217
    %v634 = vpop.f32.mrf.mxu0
    %v635 = vadd.f32 0.0, %v634
    %636 = vmatmul.f32.gmra.mxu0 %v220
    %v637 = vpop.f32.mrf.mxu0
    %v638 = vadd.f32 0.0, %v637
    %639 = vmatmul.f32.gmra.mxu0 %v223
    %v640 = vpop.f32.mrf.mxu0
    %v641 = vadd.f32 0.0, %v640
    %642 = vdwg.mxu0
    %643 = vxpose.xlu0.b32.start [1/16] %v620, 128
    %644 = vxpose.xlu0.b32.cont [2/16] %v623, 128
    %645 = vxpose.xlu0.b32.cont [3/16] %v626, 128
    %646 = vxpose.xlu0.b32.cont [4/16] %v629, 128
    %647 = vxpose.xlu0.b32.cont [5/16] %v632, 128
    %648 = vxpose.xlu0.b32.cont [6/16] %v635, 128
    %649 = vxpose.xlu0.b32.cont [7/16] %v638, 128
    %650 = vxpose.xlu0.b32.cont [8/16] %v641, 128
    %651 = vxpose.xlu0.b32.cont [9/16] 0.0, 128
    %652 = vxpose.xlu0.b32.cont [10/16] 0.0, 128
    %653 = vxpose.xlu0.b32.cont [11/16] 0.0, 128
    %654 = vxpose.xlu0.b32.cont [12/16] 0.0, 128
    %655 = vxpose.xlu0.b32.cont [13/16] 0.0, 128
    %656 = vxpose.xlu0.b32.cont [14/16] 0.0, 128
    %657 = vxpose.xlu0.b32.cont [15/16] 0.0, 128
    %658 = vxpose.xlu0.b32.end [16/16] 0.0, 128
    %v659 = vpop.trf.xlu0
    %v660 = vpop.trf.xlu0
    %v661 = vpop.trf.xlu0
    %v662 = vpop.trf.xlu0
    %v663 = vpop.trf.xlu0
    %v664 = vpop.trf.xlu0
    %v665 = vpop.trf.xlu0
    %v666 = vpop.trf.xlu0
    %v667 = vpop.trf.xlu0
    %v668 = vpop.trf.xlu0
    %v669 = vpop.trf.xlu0
    %v670 = vpop.trf.xlu0
    %v671 = vpop.trf.xlu0
    %v672 = vpop.trf.xlu0
    %v673 = vpop.trf.xlu0
    %v674 = vpop.trf.xlu0
    %676 = vset.pattern.permute.xlu0 0
    %677 = vperm.xlu0 %676, %v575
    %v678 = vpop.permute.xlu0 %677
    %681 = vset.pattern.permute.xlu0 0
    %682 = vperm.xlu0 %681, %v578
    %v683 = vpop.permute.xlu0 %682
    %686 = vset.pattern.permute.xlu0 0
    %687 = vperm.xlu0 %686, %v581
    %v688 = vpop.permute.xlu0 %687
    %691 = vset.pattern.permute.xlu0 0
    %692 = vperm.xlu0 %691, %v584
    %v693 = vpop.permute.xlu0 %692
    %696 = vset.pattern.permute.xlu0 0
    %697 = vperm.xlu0 %696, %v587
    %v698 = vpop.permute.xlu0 %697
    %701 = vset.pattern.permute.xlu0 0
    %702 = vperm.xlu0 %701, %v590
    %v703 = vpop.permute.xlu0 %702
    %706 = vset.pattern.permute.xlu0 0
    %707 = vperm.xlu0 %706, %v593
    %v708 = vpop.permute.xlu0 %707
    %711 = vset.pattern.permute.xlu0 0
    %712 = vperm.xlu0 %711, %v596
    %v713 = vpop.permute.xlu0 %712
    %v715 = vperm.slane %v659, 0
    %v716 = vadd.f32 %v678, %v715
    %v717 = vadd.f32 %v683, %v715
    %v718 = vadd.f32 %v688, %v715
    %v719 = vadd.f32 %v693, %v715
    %v720 = vadd.f32 %v698, %v715
    %v721 = vadd.f32 %v703, %v715
    %v722 = vadd.f32 %v708, %v715
    %v723 = vadd.f32 %v713, %v715
    %vm724 = vcmp.gt.f32.partialorder %v716, 0.0
    %vm725 = vcmp.gt.f32.partialorder %v717, 0.0
    %vm726 = vcmp.gt.f32.partialorder %v718, 0.0
    %vm727 = vcmp.gt.f32.partialorder %v719, 0.0
    %vm728 = vcmp.gt.f32.partialorder %v720, 0.0
    %vm729 = vcmp.gt.f32.partialorder %v721, 0.0
    %vm730 = vcmp.gt.f32.partialorder %v722, 0.0
    %vm731 = vcmp.gt.f32.partialorder %v723, 0.0
    %v732 = vmul.f32 %v716, 0.2
    %v733 = vmul.f32 %v717, 0.2
    %v734 = vmul.f32 %v718, 0.2
    %v735 = vmul.f32 %v719, 0.2
    %v736 = vmul.f32 %v720, 0.2
    %v737 = vmul.f32 %v721, 0.2
    %v738 = vmul.f32 %v722, 0.2
    %v739 = vmul.f32 %v723, 0.2
    %v740 = vsel %vm724, %v716, %v732
    %v741 = vsel %vm725, %v717, %v733
    %v742 = vsel %vm726, %v718, %v734
    %v743 = vsel %vm727, %v719, %v735
    %v744 = vsel %vm728, %v720, %v736
    %v745 = vsel %vm729, %v721, %v737
    %v746 = vsel %vm730, %v722, %v738
    %v747 = vsel %vm731, %v723, %v739
    %v748 = vld [vmem:[%s8] sm:$0xff]
    %v749 = vld [vmem:[%s8 + $0x8] sm:$0xff]
    %v750 = vld [vmem:[%s8 + $0x10] sm:$0xff]
    %v751 = vld [vmem:[%s8 + $0x18] sm:$0xff]
    %v752 = vld [vmem:[%s8 + $0x20] sm:$0xff]
    %v753 = vld [vmem:[%s8 + $0x28] sm:$0xff]
    %v754 = vld [vmem:[%s8 + $0x30] sm:$0xff]
    %v755 = vld [vmem:[%s8 + $0x38] sm:$0xff]
    %vm756 = vcmp.gt.f32.partialorder %v748, 0.0
    %vm757 = vcmp.gt.f32.partialorder %v749, 0.0
    %vm758 = vcmp.gt.f32.partialorder %v750, 0.0
    %vm759 = vcmp.gt.f32.partialorder %v751, 0.0
    %vm760 = vcmp.gt.f32.partialorder %v752, 0.0
    %vm761 = vcmp.gt.f32.partialorder %v753, 0.0
    %vm762 = vcmp.gt.f32.partialorder %v754, 0.0
    %vm763 = vcmp.gt.f32.partialorder %v755, 0.0
    %v764 = vsel %vm756, %v740, -1e+30
    %v765 = vsel %vm757, %v741, -1e+30
    %v766 = vsel %vm758, %v742, -1e+30
    %v767 = vsel %vm759, %v743, -1e+30
    %v768 = vsel %vm760, %v744, -1e+30
    %v769 = vsel %vm761, %v745, -1e+30
    %v770 = vsel %vm762, %v746, -1e+30
    %v771 = vsel %vm763, %v747, -1e+30
    %v772 = vsel %vm64, %v764, -inf
    %773 = vmax.xlane.f32.xlu0 %v772
    %v774 = vpop.xlane.xlu0 %773
    %v775 = vsel %vm64, %v765, -inf
    %776 = vmax.xlane.f32.xlu0 %v775
    %v777 = vpop.xlane.xlu0 %776
    %v778 = vsel %vm64, %v766, -inf
    %779 = vmax.xlane.f32.xlu0 %v778
    %v780 = vpop.xlane.xlu0 %779
    %v781 = vsel %vm64, %v767, -inf
    %782 = vmax.xlane.f32.xlu0 %v781
    %v783 = vpop.xlane.xlu0 %782
    %v784 = vsel %vm64, %v768, -inf
    %785 = vmax.xlane.f32.xlu0 %v784
    %v786 = vpop.xlane.xlu0 %785
    %v787 = vsel %vm64, %v769, -inf
    %788 = vmax.xlane.f32.xlu0 %v787
    %v789 = vpop.xlane.xlu0 %788
    %v790 = vsel %vm64, %v770, -inf
    %791 = vmax.xlane.f32.xlu0 %v790
    %v792 = vpop.xlane.xlu0 %791
    %v793 = vsel %vm64, %v771, -inf
    %794 = vmax.xlane.f32.xlu0 %v793
    %v795 = vpop.xlane.xlu0 %794
    %v796 = vsub.f32 %v764, %v774
    %v797 = vsub.f32 %v765, %v777
    %v798 = vsub.f32 %v766, %v780
    %v799 = vsub.f32 %v767, %v783
    %v800 = vsub.f32 %v768, %v786
    %v801 = vsub.f32 %v769, %v789
    %v802 = vsub.f32 %v770, %v792
    %v803 = vsub.f32 %v771, %v795
    %v804 = vmul.f32 %v796, 1.442695
    %v805 = vpow.pop %v804
    %v806 = vmul.f32 %v797, 1.442695
    %v807 = vpow.pop %v806
    %v808 = vmul.f32 %v798, 1.442695
    %v809 = vpow.pop %v808
    %v810 = vmul.f32 %v799, 1.442695
    %v811 = vpow.pop %v810
    %v812 = vmul.f32 %v800, 1.442695
    %v813 = vpow.pop %v812
    %v814 = vmul.f32 %v801, 1.442695
    %v815 = vpow.pop %v814
    %v816 = vmul.f32 %v802, 1.442695
    %v817 = vpow.pop %v816
    %v818 = vmul.f32 %v803, 1.442695
    %v819 = vpow.pop %v818
    %v820 = vsel %vm756, %v805, 0.0
    %v821 = vsel %vm757, %v807, 0.0
    %v822 = vsel %vm758, %v809, 0.0
    %v823 = vsel %vm759, %v811, 0.0
    %v824 = vsel %vm760, %v813, 0.0
    %v825 = vsel %vm761, %v815, 0.0
    %v826 = vsel %vm762, %v817, 0.0
    %v827 = vsel %vm763, %v819, 0.0
    %v828 = vsel %vm64, %v820, 0.0
    %829 = vadd.xlane.f32.xlu0 %v828
    %v830 = vpop.xlane.xlu0 %829
    %v831 = vsel %vm64, %v821, 0.0
    %832 = vadd.xlane.f32.xlu0 %v831
    %v833 = vpop.xlane.xlu0 %832
    %v834 = vsel %vm64, %v822, 0.0
    %835 = vadd.xlane.f32.xlu0 %v834
    %v836 = vpop.xlane.xlu0 %835
    %v837 = vsel %vm64, %v823, 0.0
    %838 = vadd.xlane.f32.xlu0 %v837
    %v839 = vpop.xlane.xlu0 %838
    %v840 = vsel %vm64, %v824, 0.0
    %841 = vadd.xlane.f32.xlu0 %v840
    %v842 = vpop.xlane.xlu0 %841
    %v843 = vsel %vm64, %v825, 0.0
    %844 = vadd.xlane.f32.xlu0 %v843
    %v845 = vpop.xlane.xlu0 %844
    %v846 = vsel %vm64, %v826, 0.0
    %847 = vadd.xlane.f32.xlu0 %v846
    %v848 = vpop.xlane.xlu0 %847
    %v849 = vsel %vm64, %v827, 0.0
    %850 = vadd.xlane.f32.xlu0 %v849
    %v851 = vpop.xlane.xlu0 %850
    %v852 = vadd.f32 %v830, 1e-09
    %v853 = vadd.f32 %v833, 1e-09
    %v854 = vadd.f32 %v836, 1e-09
    %v855 = vadd.f32 %v839, 1e-09
    %v856 = vadd.f32 %v842, 1e-09
    %v857 = vadd.f32 %v845, 1e-09
    %v858 = vadd.f32 %v848, 1e-09
    %v859 = vadd.f32 %v851, 1e-09
    %v860 = vrcp.pop %v852
    %v861 = vmul.f32 %v852, %v860
    %v862 = vsub.f32 1.0, %v861
    %v863 = vmul.f32 %v860, %v862
    %v864 = vadd.f32 %v860, %v863
    %vm865 = vweird.f32 %v852
    %vm866 = vweird.f32 %v860
    %vm867 = vmor %vm865, %vm866
    %v868 = vsel %vm867, %v860, %v864
    %v869 = vand.u32 2147483647, %v852
    %vm870 = vcmp.eq.f32.partialorder %v869, 8.507059e+37
    %v871 = vand.u32 %v852, 2147483648
    %v872 = vor.u32 1.1754944e-38, %v871
    %v873 = vsel %vm870, %v872, %v868
    %v874 = vmul.f32 %v820, %v873
    %v875 = vrcp.pop %v853
    %v876 = vmul.f32 %v853, %v875
    %v877 = vsub.f32 1.0, %v876
    %v878 = vmul.f32 %v875, %v877
    %v879 = vadd.f32 %v875, %v878
    %vm880 = vweird.f32 %v853
    %vm881 = vweird.f32 %v875
    %vm882 = vmor %vm880, %vm881
    %v883 = vsel %vm882, %v875, %v879
    %v884 = vand.u32 2147483647, %v853
    %vm885 = vcmp.eq.f32.partialorder %v884, 8.507059e+37
    %v886 = vand.u32 %v853, 2147483648
    %v887 = vor.u32 1.1754944e-38, %v886
    %v888 = vsel %vm885, %v887, %v883
    %v889 = vmul.f32 %v821, %v888
    %v890 = vrcp.pop %v854
    %v891 = vmul.f32 %v854, %v890
    %v892 = vsub.f32 1.0, %v891
    %v893 = vmul.f32 %v890, %v892
    %v894 = vadd.f32 %v890, %v893
    %vm895 = vweird.f32 %v854
    %vm896 = vweird.f32 %v890
    %vm897 = vmor %vm895, %vm896
    %v898 = vsel %vm897, %v890, %v894
    %v899 = vand.u32 2147483647, %v854
    %vm900 = vcmp.eq.f32.partialorder %v899, 8.507059e+37
    %v901 = vand.u32 %v854, 2147483648
    %v902 = vor.u32 1.1754944e-38, %v901
    %v903 = vsel %vm900, %v902, %v898
    %v904 = vmul.f32 %v822, %v903
    %v905 = vrcp.pop %v855
    %v906 = vmul.f32 %v855, %v905
    %v907 = vsub.f32 1.0, %v906
    %v908 = vmul.f32 %v905, %v907
    %v909 = vadd.f32 %v905, %v908
    %vm910 = vweird.f32 %v855
    %vm911 = vweird.f32 %v905
    %vm912 = vmor %vm910, %vm911
    %v913 = vsel %vm912, %v905, %v909
    %v914 = vand.u32 2147483647, %v855
    %vm915 = vcmp.eq.f32.partialorder %v914, 8.507059e+37
    %v916 = vand.u32 %v855, 2147483648
    %v917 = vor.u32 1.1754944e-38, %v916
    %v918 = vsel %vm915, %v917, %v913
    %v919 = vmul.f32 %v823, %v918
    %v920 = vrcp.pop %v856
    %v921 = vmul.f32 %v856, %v920
    %v922 = vsub.f32 1.0, %v921
    %v923 = vmul.f32 %v920, %v922
    %v924 = vadd.f32 %v920, %v923
    %vm925 = vweird.f32 %v856
    %vm926 = vweird.f32 %v920
    %vm927 = vmor %vm925, %vm926
    %v928 = vsel %vm927, %v920, %v924
    %v929 = vand.u32 2147483647, %v856
    %vm930 = vcmp.eq.f32.partialorder %v929, 8.507059e+37
    %v931 = vand.u32 %v856, 2147483648
    %v932 = vor.u32 1.1754944e-38, %v931
    %v933 = vsel %vm930, %v932, %v928
    %v934 = vmul.f32 %v824, %v933
    %v935 = vrcp.pop %v857
    %v936 = vmul.f32 %v857, %v935
    %v937 = vsub.f32 1.0, %v936
    %v938 = vmul.f32 %v935, %v937
    %v939 = vadd.f32 %v935, %v938
    %vm940 = vweird.f32 %v857
    %vm941 = vweird.f32 %v935
    %vm942 = vmor %vm940, %vm941
    %v943 = vsel %vm942, %v935, %v939
    %v944 = vand.u32 2147483647, %v857
    %vm945 = vcmp.eq.f32.partialorder %v944, 8.507059e+37
    %v946 = vand.u32 %v857, 2147483648
    %v947 = vor.u32 1.1754944e-38, %v946
    %v948 = vsel %vm945, %v947, %v943
    %v949 = vmul.f32 %v825, %v948
    %v950 = vrcp.pop %v858
    %v951 = vmul.f32 %v858, %v950
    %v952 = vsub.f32 1.0, %v951
    %v953 = vmul.f32 %v950, %v952
    %v954 = vadd.f32 %v950, %v953
    %vm955 = vweird.f32 %v858
    %vm956 = vweird.f32 %v950
    %vm957 = vmor %vm955, %vm956
    %v958 = vsel %vm957, %v950, %v954
    %v959 = vand.u32 2147483647, %v858
    %vm960 = vcmp.eq.f32.partialorder %v959, 8.507059e+37
    %v961 = vand.u32 %v858, 2147483648
    %v962 = vor.u32 1.1754944e-38, %v961
    %v963 = vsel %vm960, %v962, %v958
    %v964 = vmul.f32 %v826, %v963
    %v965 = vrcp.pop %v859
    %v966 = vmul.f32 %v859, %v965
    %v967 = vsub.f32 1.0, %v966
    %v968 = vmul.f32 %v965, %v967
    %v969 = vadd.f32 %v965, %v968
    %vm970 = vweird.f32 %v859
    %vm971 = vweird.f32 %v965
    %vm972 = vmor %vm970, %vm971
    %v973 = vsel %vm972, %v965, %v969
    %v974 = vand.u32 2147483647, %v859
    %vm975 = vcmp.eq.f32.partialorder %v974, 8.507059e+37
    %v976 = vand.u32 %v859, 2147483648
    %v977 = vor.u32 1.1754944e-38, %v976
    %v978 = vsel %vm975, %v977, %v973
    %v979 = vmul.f32 %v827, %v978
    %v981 = vsel %vm64, %v874, 0
    %v984 = vsel %vm64, %v889, 0
    %v987 = vsel %vm64, %v904, 0
    %v990 = vsel %vm64, %v919, 0
    %v993 = vsel %vm64, %v934, 0
    %v996 = vsel %vm64, %v949, 0
    %v999 = vsel %vm64, %v964, 0
    %v1002 = vsel %vm64, %v979, 0
    %1004 = vmatpush.msra.mxu0 0.0
    %1005 = vmatpush.msra.mxu0 0.0
    %1006 = vmatpush.msra.mxu0 0.0
    %1007 = vmatpush.msra.mxu0 0.0
    %1008 = vmatpush.msra.mxu0 0.0
    %1009 = vmatpush.msra.mxu0 0.0
    %1010 = vmatpush.msra.mxu0 0.0
    %1011 = vmatpush.msra.mxu0 0.0
    %1012 = vmatpush.msra.mxu0 %v264
    %1013 = vmatpush.msra.mxu0 %v261
    %1014 = vmatpush.msra.mxu0 %v258
    %1015 = vmatpush.msra.mxu0 %v255
    %1016 = vmatpush.msra.mxu0 %v252
    %1017 = vmatpush.msra.mxu0 %v249
    %1018 = vmatpush.msra.mxu0 %v246
    %1019 = vmatpush.msra.mxu0 %v243
    %1020 = vmatmul.f32.gmra.mxu0 %v981
    %v1021 = vpop.f32.mrf.mxu0
    %v1022 = vadd.f32 0.0, %v1021
    %1023 = vmatmul.f32.gmra.mxu0 %v984
    %v1024 = vpop.f32.mrf.mxu0
    %v1025 = vadd.f32 0.0, %v1024
    %1026 = vmatmul.f32.gmra.mxu0 %v987
    %v1027 = vpop.f32.mrf.mxu0
    %v1028 = vadd.f32 0.0, %v1027
    %1029 = vmatmul.f32.gmra.mxu0 %v990
    %v1030 = vpop.f32.mrf.mxu0
    %v1031 = vadd.f32 0.0, %v1030
    %1032 = vmatmul.f32.gmra.mxu0 %v993
    %v1033 = vpop.f32.mrf.mxu0
    %v1034 = vadd.f32 0.0, %v1033
    %1035 = vmatmul.f32.gmra.mxu0 %v996
    %v1036 = vpop.f32.mrf.mxu0
    %v1037 = vadd.f32 0.0, %v1036
    %1038 = vmatmul.f32.gmra.mxu0 %v999
    %v1039 = vpop.f32.mrf.mxu0
    %v1040 = vadd.f32 0.0, %v1039
    %1041 = vmatmul.f32.gmra.mxu0 %v1002
    %v1042 = vpop.f32.mrf.mxu0
    %v1043 = vadd.f32 0.0, %v1042
    %1044 = vdwg.mxu0
    %1045 = vmatpush.msra.mxu0 0.0
    %1046 = vmatpush.msra.mxu0 0.0
    %1047 = vmatpush.msra.mxu0 0.0
    %1048 = vmatpush.msra.mxu0 0.0
    %1049 = vmatpush.msra.mxu0 0.0
    %1050 = vmatpush.msra.mxu0 0.0
    %1051 = vmatpush.msra.mxu0 0.0
    %1052 = vmatpush.msra.mxu0 0.0
    %1053 = vmatpush.msra.mxu0 %v305
    %1054 = vmatpush.msra.mxu0 %v302
    %1055 = vmatpush.msra.mxu0 %v299
    %1056 = vmatpush.msra.mxu0 %v296
    %1057 = vmatpush.msra.mxu0 %v293
    %1058 = vmatpush.msra.mxu0 %v290
    %1059 = vmatpush.msra.mxu0 %v287
    %1060 = vmatpush.msra.mxu0 %v284
    %1061 = vmatmul.f32.gmra.mxu0 %v981
    %v1062 = vpop.f32.mrf.mxu0
    %v1063 = vadd.f32 0.0, %v1062
    %1064 = vmatmul.f32.gmra.mxu0 %v984
    %v1065 = vpop.f32.mrf.mxu0
    %v1066 = vadd.f32 0.0, %v1065
    %1067 = vmatmul.f32.gmra.mxu0 %v987
    %v1068 = vpop.f32.mrf.mxu0
    %v1069 = vadd.f32 0.0, %v1068
    %1070 = vmatmul.f32.gmra.mxu0 %v990
    %v1071 = vpop.f32.mrf.mxu0
    %v1072 = vadd.f32 0.0, %v1071
    %1073 = vmatmul.f32.gmra.mxu0 %v993
    %v1074 = vpop.f32.mrf.mxu0
    %v1075 = vadd.f32 0.0, %v1074
    %1076 = vmatmul.f32.gmra.mxu0 %v996
    %v1077 = vpop.f32.mrf.mxu0
    %v1078 = vadd.f32 0.0, %v1077
    %1079 = vmatmul.f32.gmra.mxu0 %v999
    %v1080 = vpop.f32.mrf.mxu0
    %v1081 = vadd.f32 0.0, %v1080
    %1082 = vmatmul.f32.gmra.mxu0 %v1002
    %v1083 = vpop.f32.mrf.mxu0
    %v1084 = vadd.f32 0.0, %v1083
    %1085 = vdwg.mxu0
    %1086 = vmatpush.msra.mxu0 0.0
    %1087 = vmatpush.msra.mxu0 0.0
    %1088 = vmatpush.msra.mxu0 0.0
    %1089 = vmatpush.msra.mxu0 0.0
    %1090 = vmatpush.msra.mxu0 0.0
    %1091 = vmatpush.msra.mxu0 0.0
    %1092 = vmatpush.msra.mxu0 0.0
    %1093 = vmatpush.msra.mxu0 0.0
    %1094 = vmatpush.msra.mxu0 %v346
    %1095 = vmatpush.msra.mxu0 %v343
    %1096 = vmatpush.msra.mxu0 %v340
    %1097 = vmatpush.msra.mxu0 %v337
    %1098 = vmatpush.msra.mxu0 %v334
    %1099 = vmatpush.msra.mxu0 %v331
    %1100 = vmatpush.msra.mxu0 %v328
    %1101 = vmatpush.msra.mxu0 %v325
    %1102 = vmatmul.f32.gmra.mxu0 %v981
    %v1103 = vpop.f32.mrf.mxu0
    %v1104 = vadd.f32 0.0, %v1103
    %1105 = vmatmul.f32.gmra.mxu0 %v984
    %v1106 = vpop.f32.mrf.mxu0
    %v1107 = vadd.f32 0.0, %v1106
    %1108 = vmatmul.f32.gmra.mxu0 %v987
    %v1109 = vpop.f32.mrf.mxu0
    %v1110 = vadd.f32 0.0, %v1109
    %1111 = vmatmul.f32.gmra.mxu0 %v990
    %v1112 = vpop.f32.mrf.mxu0
    %v1113 = vadd.f32 0.0, %v1112
    %1114 = vmatmul.f32.gmra.mxu0 %v993
    %v1115 = vpop.f32.mrf.mxu0
    %v1116 = vadd.f32 0.0, %v1115
    %1117 = vmatmul.f32.gmra.mxu0 %v996
    %v1118 = vpop.f32.mrf.mxu0
    %v1119 = vadd.f32 0.0, %v1118
    %1120 = vmatmul.f32.gmra.mxu0 %v999
    %v1121 = vpop.f32.mrf.mxu0
    %v1122 = vadd.f32 0.0, %v1121
    %1123 = vmatmul.f32.gmra.mxu0 %v1002
    %v1124 = vpop.f32.mrf.mxu0
    %v1125 = vadd.f32 0.0, %v1124
    %1126 = vdwg.mxu0
    %1127 = vmatpush.msra.mxu0 0.0
    %1128 = vmatpush.msra.mxu0 0.0
    %1129 = vmatpush.msra.mxu0 0.0
    %1130 = vmatpush.msra.mxu0 0.0
    %1131 = vmatpush.msra.mxu0 0.0
    %1132 = vmatpush.msra.mxu0 0.0
    %1133 = vmatpush.msra.mxu0 0.0
    %1134 = vmatpush.msra.mxu0 0.0
    %1135 = vmatpush.msra.mxu0 %v387
    %1136 = vmatpush.msra.mxu0 %v384
    %1137 = vmatpush.msra.mxu0 %v381
    %1138 = vmatpush.msra.mxu0 %v378
    %1139 = vmatpush.msra.mxu0 %v375
    %1140 = vmatpush.msra.mxu0 %v372
    %1141 = vmatpush.msra.mxu0 %v369
    %1142 = vmatpush.msra.mxu0 %v366
    %1143 = vmatmul.f32.gmra.mxu0 %v981
    %v1144 = vpop.f32.mrf.mxu0
    %v1145 = vadd.f32 0.0, %v1144
    %1146 = vmatmul.f32.gmra.mxu0 %v984
    %v1147 = vpop.f32.mrf.mxu0
    %v1148 = vadd.f32 0.0, %v1147
    %1149 = vmatmul.f32.gmra.mxu0 %v987
    %v1150 = vpop.f32.mrf.mxu0
    %v1151 = vadd.f32 0.0, %v1150
    %1152 = vmatmul.f32.gmra.mxu0 %v990
    %v1153 = vpop.f32.mrf.mxu0
    %v1154 = vadd.f32 0.0, %v1153
    %1155 = vmatmul.f32.gmra.mxu0 %v993
    %v1156 = vpop.f32.mrf.mxu0
    %v1157 = vadd.f32 0.0, %v1156
    %1158 = vmatmul.f32.gmra.mxu0 %v996
    %v1159 = vpop.f32.mrf.mxu0
    %v1160 = vadd.f32 0.0, %v1159
    %1161 = vmatmul.f32.gmra.mxu0 %v999
    %v1162 = vpop.f32.mrf.mxu0
    %v1163 = vadd.f32 0.0, %v1162
    %1164 = vmatmul.f32.gmra.mxu0 %v1002
    %v1165 = vpop.f32.mrf.mxu0
    %v1166 = vadd.f32 0.0, %v1165
    %1167 = vdwg.mxu0
    %1168 = vmatpush.msra.mxu0 0.0
    %1169 = vmatpush.msra.mxu0 0.0
    %1170 = vmatpush.msra.mxu0 0.0
    %1171 = vmatpush.msra.mxu0 0.0
    %1172 = vmatpush.msra.mxu0 0.0
    %1173 = vmatpush.msra.mxu0 0.0
    %1174 = vmatpush.msra.mxu0 0.0
    %1175 = vmatpush.msra.mxu0 0.0
    %1176 = vmatpush.msra.mxu0 %v428
    %1177 = vmatpush.msra.mxu0 %v425
    %1178 = vmatpush.msra.mxu0 %v422
    %1179 = vmatpush.msra.mxu0 %v419
    %1180 = vmatpush.msra.mxu0 %v416
    %1181 = vmatpush.msra.mxu0 %v413
    %1182 = vmatpush.msra.mxu0 %v410
    %1183 = vmatpush.msra.mxu0 %v407
    %1184 = vmatmul.f32.gmra.mxu0 %v981
    %v1185 = vpop.f32.mrf.mxu0
    %v1186 = vadd.f32 0.0, %v1185
    %1187 = vmatmul.f32.gmra.mxu0 %v984
    %v1188 = vpop.f32.mrf.mxu0
    %v1189 = vadd.f32 0.0, %v1188
    %1190 = vmatmul.f32.gmra.mxu0 %v987
    %v1191 = vpop.f32.mrf.mxu0
    %v1192 = vadd.f32 0.0, %v1191
    %1193 = vmatmul.f32.gmra.mxu0 %v990
    %v1194 = vpop.f32.mrf.mxu0
    %v1195 = vadd.f32 0.0, %v1194
    %1196 = vmatmul.f32.gmra.mxu0 %v993
    %v1197 = vpop.f32.mrf.mxu0
    %v1198 = vadd.f32 0.0, %v1197
    %1199 = vmatmul.f32.gmra.mxu0 %v996
    %v1200 = vpop.f32.mrf.mxu0
    %v1201 = vadd.f32 0.0, %v1200
    %1202 = vmatmul.f32.gmra.mxu0 %v999
    %v1203 = vpop.f32.mrf.mxu0
    %v1204 = vadd.f32 0.0, %v1203
    %1205 = vmatmul.f32.gmra.mxu0 %v1002
    %v1206 = vpop.f32.mrf.mxu0
    %v1207 = vadd.f32 0.0, %v1206
    %1208 = vdwg.mxu0
    %1209 = vmatpush.msra.mxu0 0.0
    %1210 = vmatpush.msra.mxu0 0.0
    %1211 = vmatpush.msra.mxu0 0.0
    %1212 = vmatpush.msra.mxu0 0.0
    %1213 = vmatpush.msra.mxu0 0.0
    %1214 = vmatpush.msra.mxu0 0.0
    %1215 = vmatpush.msra.mxu0 0.0
    %1216 = vmatpush.msra.mxu0 0.0
    %1217 = vmatpush.msra.mxu0 %v469
    %1218 = vmatpush.msra.mxu0 %v466
    %1219 = vmatpush.msra.mxu0 %v463
    %1220 = vmatpush.msra.mxu0 %v460
    %1221 = vmatpush.msra.mxu0 %v457
    %1222 = vmatpush.msra.mxu0 %v454
    %1223 = vmatpush.msra.mxu0 %v451
    %1224 = vmatpush.msra.mxu0 %v448
    %1225 = vmatmul.f32.gmra.mxu0 %v981
    %v1226 = vpop.f32.mrf.mxu0
    %v1227 = vadd.f32 0.0, %v1226
    %1228 = vmatmul.f32.gmra.mxu0 %v984
    %v1229 = vpop.f32.mrf.mxu0
    %v1230 = vadd.f32 0.0, %v1229
    %1231 = vmatmul.f32.gmra.mxu0 %v987
    %v1232 = vpop.f32.mrf.mxu0
    %v1233 = vadd.f32 0.0, %v1232
    %1234 = vmatmul.f32.gmra.mxu0 %v990
    %v1235 = vpop.f32.mrf.mxu0
    %v1236 = vadd.f32 0.0, %v1235
    %1237 = vmatmul.f32.gmra.mxu0 %v993
    %v1238 = vpop.f32.mrf.mxu0
    %v1239 = vadd.f32 0.0, %v1238
    %1240 = vmatmul.f32.gmra.mxu0 %v996
    %v1241 = vpop.f32.mrf.mxu0
    %v1242 = vadd.f32 0.0, %v1241
    %1243 = vmatmul.f32.gmra.mxu0 %v999
    %v1244 = vpop.f32.mrf.mxu0
    %v1245 = vadd.f32 0.0, %v1244
    %1246 = vmatmul.f32.gmra.mxu0 %v1002
    %v1247 = vpop.f32.mrf.mxu0
    %v1248 = vadd.f32 0.0, %v1247
    %1249 = vdwg.mxu0
    %1250 = vmatpush.msra.mxu0 0.0
    %1251 = vmatpush.msra.mxu0 0.0
    %1252 = vmatpush.msra.mxu0 0.0
    %1253 = vmatpush.msra.mxu0 0.0
    %1254 = vmatpush.msra.mxu0 0.0
    %1255 = vmatpush.msra.mxu0 0.0
    %1256 = vmatpush.msra.mxu0 0.0
    %1257 = vmatpush.msra.mxu0 0.0
    %1258 = vmatpush.msra.mxu0 %v510
    %1259 = vmatpush.msra.mxu0 %v507
    %1260 = vmatpush.msra.mxu0 %v504
    %1261 = vmatpush.msra.mxu0 %v501
    %1262 = vmatpush.msra.mxu0 %v498
    %1263 = vmatpush.msra.mxu0 %v495
    %1264 = vmatpush.msra.mxu0 %v492
    %1265 = vmatpush.msra.mxu0 %v489
    %1266 = vmatmul.f32.gmra.mxu0 %v981
    %v1267 = vpop.f32.mrf.mxu0
    %v1268 = vadd.f32 0.0, %v1267
    %1269 = vmatmul.f32.gmra.mxu0 %v984
    %v1270 = vpop.f32.mrf.mxu0
    %v1271 = vadd.f32 0.0, %v1270
    %1272 = vmatmul.f32.gmra.mxu0 %v987
    %v1273 = vpop.f32.mrf.mxu0
    %v1274 = vadd.f32 0.0, %v1273
    %1275 = vmatmul.f32.gmra.mxu0 %v990
    %v1276 = vpop.f32.mrf.mxu0
    %v1277 = vadd.f32 0.0, %v1276
    %1278 = vmatmul.f32.gmra.mxu0 %v993
    %v1279 = vpop.f32.mrf.mxu0
    %v1280 = vadd.f32 0.0, %v1279
    %1281 = vmatmul.f32.gmra.mxu0 %v996
    %v1282 = vpop.f32.mrf.mxu0
    %v1283 = vadd.f32 0.0, %v1282
    %1284 = vmatmul.f32.gmra.mxu0 %v999
    %v1285 = vpop.f32.mrf.mxu0
    %v1286 = vadd.f32 0.0, %v1285
    %1287 = vmatmul.f32.gmra.mxu0 %v1002
    %v1288 = vpop.f32.mrf.mxu0
    %v1289 = vadd.f32 0.0, %v1288
    %1290 = vdwg.mxu0
    %1291 = vmatpush.msra.mxu0 0.0
    %1292 = vmatpush.msra.mxu0 0.0
    %1293 = vmatpush.msra.mxu0 0.0
    %1294 = vmatpush.msra.mxu0 0.0
    %1295 = vmatpush.msra.mxu0 0.0
    %1296 = vmatpush.msra.mxu0 0.0
    %1297 = vmatpush.msra.mxu0 0.0
    %1298 = vmatpush.msra.mxu0 0.0
    %1299 = vmatpush.msra.mxu0 %v551
    %1300 = vmatpush.msra.mxu0 %v548
    %1301 = vmatpush.msra.mxu0 %v545
    %1302 = vmatpush.msra.mxu0 %v542
    %1303 = vmatpush.msra.mxu0 %v539
    %1304 = vmatpush.msra.mxu0 %v536
    %1305 = vmatpush.msra.mxu0 %v533
    %1306 = vmatpush.msra.mxu0 %v530
    %1307 = vmatmul.f32.gmra.mxu0 %v981
    %v1308 = vpop.f32.mrf.mxu0
    %v1309 = vadd.f32 0.0, %v1308
    %1310 = vmatmul.f32.gmra.mxu0 %v984
    %v1311 = vpop.f32.mrf.mxu0
    %v1312 = vadd.f32 0.0, %v1311
    %1313 = vmatmul.f32.gmra.mxu0 %v987
    %v1314 = vpop.f32.mrf.mxu0
    %v1315 = vadd.f32 0.0, %v1314
    %1316 = vmatmul.f32.gmra.mxu0 %v990
    %v1317 = vpop.f32.mrf.mxu0
    %v1318 = vadd.f32 0.0, %v1317
    %1319 = vmatmul.f32.gmra.mxu0 %v993
    %v1320 = vpop.f32.mrf.mxu0
    %v1321 = vadd.f32 0.0, %v1320
    %1322 = vmatmul.f32.gmra.mxu0 %v996
    %v1323 = vpop.f32.mrf.mxu0
    %v1324 = vadd.f32 0.0, %v1323
    %1325 = vmatmul.f32.gmra.mxu0 %v999
    %v1326 = vpop.f32.mrf.mxu0
    %v1327 = vadd.f32 0.0, %v1326
    %1328 = vmatmul.f32.gmra.mxu0 %v1002
    %v1329 = vpop.f32.mrf.mxu0
    %v1330 = vadd.f32 0.0, %v1329
    %1331 = vdwg.mxu0
    %vm1332 = vcmp.gt.f32.partialorder %v1022, 0.0
    %vm1333 = vcmp.gt.f32.partialorder %v1063, 0.0
    %vm1334 = vcmp.gt.f32.partialorder %v1104, 0.0
    %vm1335 = vcmp.gt.f32.partialorder %v1145, 0.0
    %vm1336 = vcmp.gt.f32.partialorder %v1186, 0.0
    %vm1337 = vcmp.gt.f32.partialorder %v1227, 0.0
    %vm1338 = vcmp.gt.f32.partialorder %v1268, 0.0
    %vm1339 = vcmp.gt.f32.partialorder %v1309, 0.0
    %vm1340 = vcmp.gt.f32.partialorder %v1025, 0.0
    %vm1341 = vcmp.gt.f32.partialorder %v1066, 0.0
    %vm1342 = vcmp.gt.f32.partialorder %v1107, 0.0
    %vm1343 = vcmp.gt.f32.partialorder %v1148, 0.0
    %vm1344 = vcmp.gt.f32.partialorder %v1189, 0.0
    %vm1345 = vcmp.gt.f32.partialorder %v1230, 0.0
    %vm1346 = vcmp.gt.f32.partialorder %v1271, 0.0
    %vm1347 = vcmp.gt.f32.partialorder %v1312, 0.0
    %vm1348 = vcmp.gt.f32.partialorder %v1028, 0.0
    %vm1349 = vcmp.gt.f32.partialorder %v1069, 0.0
    %vm1350 = vcmp.gt.f32.partialorder %v1110, 0.0
    %vm1351 = vcmp.gt.f32.partialorder %v1151, 0.0
    %vm1352 = vcmp.gt.f32.partialorder %v1192, 0.0
    %vm1353 = vcmp.gt.f32.partialorder %v1233, 0.0
    %vm1354 = vcmp.gt.f32.partialorder %v1274, 0.0
    %vm1355 = vcmp.gt.f32.partialorder %v1315, 0.0
    %vm1356 = vcmp.gt.f32.partialorder %v1031, 0.0
    %vm1357 = vcmp.gt.f32.partialorder %v1072, 0.0
    %vm1358 = vcmp.gt.f32.partialorder %v1113, 0.0
    %vm1359 = vcmp.gt.f32.partialorder %v1154, 0.0
    %vm1360 = vcmp.gt.f32.partialorder %v1195, 0.0
    %vm1361 = vcmp.gt.f32.partialorder %v1236, 0.0
    %vm1362 = vcmp.gt.f32.partialorder %v1277, 0.0
    %vm1363 = vcmp.gt.f32.partialorder %v1318, 0.0
    %vm1364 = vcmp.gt.f32.partialorder %v1034, 0.0
    %vm1365 = vcmp.gt.f32.partialorder %v1075, 0.0
    %vm1366 = vcmp.gt.f32.partialorder %v1116, 0.0
    %vm1367 = vcmp.gt.f32.partialorder %v1157, 0.0
    %vm1368 = vcmp.gt.f32.partialorder %v1198, 0.0
    %vm1369 = vcmp.gt.f32.partialorder %v1239, 0.0
    %vm1370 = vcmp.gt.f32.partialorder %v1280, 0.0
    %vm1371 = vcmp.gt.f32.partialorder %v1321, 0.0
    %vm1372 = vcmp.gt.f32.partialorder %v1037, 0.0
    %vm1373 = vcmp.gt.f32.partialorder %v1078, 0.0
    %vm1374 = vcmp.gt.f32.partialorder %v1119, 0.0
    %vm1375 = vcmp.gt.f32.partialorder %v1160, 0.0
    %vm1376 = vcmp.gt.f32.partialorder %v1201, 0.0
    %vm1377 = vcmp.gt.f32.partialorder %v1242, 0.0
    %vm1378 = vcmp.gt.f32.partialorder %v1283, 0.0
    %vm1379 = vcmp.gt.f32.partialorder %v1324, 0.0
    %vm1380 = vcmp.gt.f32.partialorder %v1040, 0.0
    %vm1381 = vcmp.gt.f32.partialorder %v1081, 0.0
    %vm1382 = vcmp.gt.f32.partialorder %v1122, 0.0
    %vm1383 = vcmp.gt.f32.partialorder %v1163, 0.0
    %vm1384 = vcmp.gt.f32.partialorder %v1204, 0.0
    %vm1385 = vcmp.gt.f32.partialorder %v1245, 0.0
    %vm1386 = vcmp.gt.f32.partialorder %v1286, 0.0
    %vm1387 = vcmp.gt.f32.partialorder %v1327, 0.0
    %vm1388 = vcmp.gt.f32.partialorder %v1043, 0.0
    %vm1389 = vcmp.gt.f32.partialorder %v1084, 0.0
    %vm1390 = vcmp.gt.f32.partialorder %v1125, 0.0
    %vm1391 = vcmp.gt.f32.partialorder %v1166, 0.0
    %vm1392 = vcmp.gt.f32.partialorder %v1207, 0.0
    %vm1393 = vcmp.gt.f32.partialorder %v1248, 0.0
    %vm1394 = vcmp.gt.f32.partialorder %v1289, 0.0
    %vm1395 = vcmp.gt.f32.partialorder %v1330, 0.0
    %v1396 = vmin.f32 %v1022, 0.0
    %v1397 = vmin.f32 %v1063, 0.0
    %v1398 = vmin.f32 %v1104, 0.0
    %v1399 = vmin.f32 %v1145, 0.0
    %v1400 = vmin.f32 %v1186, 0.0
    %v1401 = vmin.f32 %v1227, 0.0
    %v1402 = vmin.f32 %v1268, 0.0
    %v1403 = vmin.f32 %v1309, 0.0
    %v1404 = vmin.f32 %v1025, 0.0
    %v1405 = vmin.f32 %v1066, 0.0
    %v1406 = vmin.f32 %v1107, 0.0
    %v1407 = vmin.f32 %v1148, 0.0
    %v1408 = vmin.f32 %v1189, 0.0
    %v1409 = vmin.f32 %v1230, 0.0
    %v1410 = vmin.f32 %v1271, 0.0
    %v1411 = vmin.f32 %v1312, 0.0
    %v1412 = vmin.f32 %v1028, 0.0
    %v1413 = vmin.f32 %v1069, 0.0
    %v1414 = vmin.f32 %v1110, 0.0
    %v1415 = vmin.f32 %v1151, 0.0
    %v1416 = vmin.f32 %v1192, 0.0
    %v1417 = vmin.f32 %v1233, 0.0
    %v1418 = vmin.f32 %v1274, 0.0
    %v1419 = vmin.f32 %v1315, 0.0
    %v1420 = vmin.f32 %v1031, 0.0
    %v1421 = vmin.f32 %v1072, 0.0
    %v1422 = vmin.f32 %v1113, 0.0
    %v1423 = vmin.f32 %v1154, 0.0
    %v1424 = vmin.f32 %v1195, 0.0
    %v1425 = vmin.f32 %v1236, 0.0
    %v1426 = vmin.f32 %v1277, 0.0
    %v1427 = vmin.f32 %v1318, 0.0
    %v1428 = vmin.f32 %v1034, 0.0
    %v1429 = vmin.f32 %v1075, 0.0
    %v1430 = vmin.f32 %v1116, 0.0
    %v1431 = vmin.f32 %v1157, 0.0
    %v1432 = vmin.f32 %v1198, 0.0
    %v1433 = vmin.f32 %v1239, 0.0
    %v1434 = vmin.f32 %v1280, 0.0
    %v1435 = vmin.f32 %v1321, 0.0
    %v1436 = vmin.f32 %v1037, 0.0
    %v1437 = vmin.f32 %v1078, 0.0
    %v1438 = vmin.f32 %v1119, 0.0
    %v1439 = vmin.f32 %v1160, 0.0
    %v1440 = vmin.f32 %v1201, 0.0
    %v1441 = vmin.f32 %v1242, 0.0
    %v1442 = vmin.f32 %v1283, 0.0
    %v1443 = vmin.f32 %v1324, 0.0
    %v1444 = vmin.f32 %v1040, 0.0
    %v1445 = vmin.f32 %v1081, 0.0
    %v1446 = vmin.f32 %v1122, 0.0
    %v1447 = vmin.f32 %v1163, 0.0
    %v1448 = vmin.f32 %v1204, 0.0
    %v1449 = vmin.f32 %v1245, 0.0
    %v1450 = vmin.f32 %v1286, 0.0
    %v1451 = vmin.f32 %v1327, 0.0
    %v1452 = vmin.f32 %v1043, 0.0
    %v1453 = vmin.f32 %v1084, 0.0
    %v1454 = vmin.f32 %v1125, 0.0
    %v1455 = vmin.f32 %v1166, 0.0
    %v1456 = vmin.f32 %v1207, 0.0
    %v1457 = vmin.f32 %v1248, 0.0
    %v1458 = vmin.f32 %v1289, 0.0
    %v1459 = vmin.f32 %v1330, 0.0
    %v1460 = vmul.f32 %v1396, 1.442695
    %v1461 = vpow.pop %v1460
    %v1462 = vmul.f32 %v1397, 1.442695
    %v1463 = vpow.pop %v1462
    %v1464 = vmul.f32 %v1398, 1.442695
    %v1465 = vpow.pop %v1464
    %v1466 = vmul.f32 %v1399, 1.442695
    %v1467 = vpow.pop %v1466
    %v1468 = vmul.f32 %v1400, 1.442695
    %v1469 = vpow.pop %v1468
    %v1470 = vmul.f32 %v1401, 1.442695
    %v1471 = vpow.pop %v1470
    %v1472 = vmul.f32 %v1402, 1.442695
    %v1473 = vpow.pop %v1472
    %v1474 = vmul.f32 %v1403, 1.442695
    %v1475 = vpow.pop %v1474
    %v1476 = vmul.f32 %v1404, 1.442695
    %v1477 = vpow.pop %v1476
    %v1478 = vmul.f32 %v1405, 1.442695
    %v1479 = vpow.pop %v1478
    %v1480 = vmul.f32 %v1406, 1.442695
    %v1481 = vpow.pop %v1480
    %v1482 = vmul.f32 %v1407, 1.442695
    %v1483 = vpow.pop %v1482
    %v1484 = vmul.f32 %v1408, 1.442695
    %v1485 = vpow.pop %v1484
    %v1486 = vmul.f32 %v1409, 1.442695
    %v1487 = vpow.pop %v1486
    %v1488 = vmul.f32 %v1410, 1.442695
    %v1489 = vpow.pop %v1488
    %v1490 = vmul.f32 %v1411, 1.442695
    %v1491 = vpow.pop %v1490
    %v1492 = vmul.f32 %v1412, 1.442695
    %v1493 = vpow.pop %v1492
    %v1494 = vmul.f32 %v1413, 1.442695
    %v1495 = vpow.pop %v1494
    %v1496 = vmul.f32 %v1414, 1.442695
    %v1497 = vpow.pop %v1496
    %v1498 = vmul.f32 %v1415, 1.442695
    %v1499 = vpow.pop %v1498
    %v1500 = vmul.f32 %v1416, 1.442695
    %v1501 = vpow.pop %v1500
    %v1502 = vmul.f32 %v1417, 1.442695
    %v1503 = vpow.pop %v1502
    %v1504 = vmul.f32 %v1418, 1.442695
    %v1505 = vpow.pop %v1504
    %v1506 = vmul.f32 %v1419, 1.442695
    %v1507 = vpow.pop %v1506
    %v1508 = vmul.f32 %v1420, 1.442695
    %v1509 = vpow.pop %v1508
    %v1510 = vmul.f32 %v1421, 1.442695
    %v1511 = vpow.pop %v1510
    %v1512 = vmul.f32 %v1422, 1.442695
    %v1513 = vpow.pop %v1512
    %v1514 = vmul.f32 %v1423, 1.442695
    %v1515 = vpow.pop %v1514
    %v1516 = vmul.f32 %v1424, 1.442695
    %v1517 = vpow.pop %v1516
    %v1518 = vmul.f32 %v1425, 1.442695
    %v1519 = vpow.pop %v1518
    %v1520 = vmul.f32 %v1426, 1.442695
    %v1521 = vpow.pop %v1520
    %v1522 = vmul.f32 %v1427, 1.442695
    %v1523 = vpow.pop %v1522
    %v1524 = vmul.f32 %v1428, 1.442695
    %v1525 = vpow.pop %v1524
    %v1526 = vmul.f32 %v1429, 1.442695
    %v1527 = vpow.pop %v1526
    %v1528 = vmul.f32 %v1430, 1.442695
    %v1529 = vpow.pop %v1528
    %v1530 = vmul.f32 %v1431, 1.442695
    %v1531 = vpow.pop %v1530
    %v1532 = vmul.f32 %v1432, 1.442695
    %v1533 = vpow.pop %v1532
    %v1534 = vmul.f32 %v1433, 1.442695
    %v1535 = vpow.pop %v1534
    %v1536 = vmul.f32 %v1434, 1.442695
    %v1537 = vpow.pop %v1536
    %v1538 = vmul.f32 %v1435, 1.442695
    %v1539 = vpow.pop %v1538
    %v1540 = vmul.f32 %v1436, 1.442695
    %v1541 = vpow.pop %v1540
    %v1542 = vmul.f32 %v1437, 1.442695
    %v1543 = vpow.pop %v1542
    %v1544 = vmul.f32 %v1438, 1.442695
    %v1545 = vpow.pop %v1544
    %v1546 = vmul.f32 %v1439, 1.442695
    %v1547 = vpow.pop %v1546
    %v1548 = vmul.f32 %v1440, 1.442695
    %v1549 = vpow.pop %v1548
    %v1550 = vmul.f32 %v1441, 1.442695
    %v1551 = vpow.pop %v1550
    %v1552 = vmul.f32 %v1442, 1.442695
    %v1553 = vpow.pop %v1552
    %v1554 = vmul.f32 %v1443, 1.442695
    %v1555 = vpow.pop %v1554
    %v1556 = vmul.f32 %v1444, 1.442695
    %v1557 = vpow.pop %v1556
    %v1558 = vmul.f32 %v1445, 1.442695
    %v1559 = vpow.pop %v1558
    %v1560 = vmul.f32 %v1446, 1.442695
    %v1561 = vpow.pop %v1560
    %v1562 = vmul.f32 %v1447, 1.442695
    %v1563 = vpow.pop %v1562
    %v1564 = vmul.f32 %v1448, 1.442695
    %v1565 = vpow.pop %v1564
    %v1566 = vmul.f32 %v1449, 1.442695
    %v1567 = vpow.pop %v1566
    %v1568 = vmul.f32 %v1450, 1.442695
    %v1569 = vpow.pop %v1568
    %v1570 = vmul.f32 %v1451, 1.442695
    %v1571 = vpow.pop %v1570
    %v1572 = vmul.f32 %v1452, 1.442695
    %v1573 = vpow.pop %v1572
    %v1574 = vmul.f32 %v1453, 1.442695
    %v1575 = vpow.pop %v1574
    %v1576 = vmul.f32 %v1454, 1.442695
    %v1577 = vpow.pop %v1576
    %v1578 = vmul.f32 %v1455, 1.442695
    %v1579 = vpow.pop %v1578
    %v1580 = vmul.f32 %v1456, 1.442695
    %v1581 = vpow.pop %v1580
    %v1582 = vmul.f32 %v1457, 1.442695
    %v1583 = vpow.pop %v1582
    %v1584 = vmul.f32 %v1458, 1.442695
    %v1585 = vpow.pop %v1584
    %v1586 = vmul.f32 %v1459, 1.442695
    %v1587 = vpow.pop %v1586
    %v1588 = vsub.f32 %v1461, 1.0
    %v1589 = vsub.f32 %v1463, 1.0
    %v1590 = vsub.f32 %v1465, 1.0
    %v1591 = vsub.f32 %v1467, 1.0
    %v1592 = vsub.f32 %v1469, 1.0
    %v1593 = vsub.f32 %v1471, 1.0
    %v1594 = vsub.f32 %v1473, 1.0
    %v1595 = vsub.f32 %v1475, 1.0
    %v1596 = vsub.f32 %v1477, 1.0
    %v1597 = vsub.f32 %v1479, 1.0
    %v1598 = vsub.f32 %v1481, 1.0
    %v1599 = vsub.f32 %v1483, 1.0
    %v1600 = vsub.f32 %v1485, 1.0
    %v1601 = vsub.f32 %v1487, 1.0
    %v1602 = vsub.f32 %v1489, 1.0
    %v1603 = vsub.f32 %v1491, 1.0
    %v1604 = vsub.f32 %v1493, 1.0
    %v1605 = vsub.f32 %v1495, 1.0
    %v1606 = vsub.f32 %v1497, 1.0
    %v1607 = vsub.f32 %v1499, 1.0
    %v1608 = vsub.f32 %v1501, 1.0
    %v1609 = vsub.f32 %v1503, 1.0
    %v1610 = vsub.f32 %v1505, 1.0
    %v1611 = vsub.f32 %v1507, 1.0
    %v1612 = vsub.f32 %v1509, 1.0
    %v1613 = vsub.f32 %v1511, 1.0
    %v1614 = vsub.f32 %v1513, 1.0
    %v1615 = vsub.f32 %v1515, 1.0
    %v1616 = vsub.f32 %v1517, 1.0
    %v1617 = vsub.f32 %v1519, 1.0
    %v1618 = vsub.f32 %v1521, 1.0
    %v1619 = vsub.f32 %v1523, 1.0
    %v1620 = vsub.f32 %v1525, 1.0
    %v1621 = vsub.f32 %v1527, 1.0
    %v1622 = vsub.f32 %v1529, 1.0
    %v1623 = vsub.f32 %v1531, 1.0
    %v1624 = vsub.f32 %v1533, 1.0
    %v1625 = vsub.f32 %v1535, 1.0
    %v1626 = vsub.f32 %v1537, 1.0
    %v1627 = vsub.f32 %v1539, 1.0
    %v1628 = vsub.f32 %v1541, 1.0
    %v1629 = vsub.f32 %v1543, 1.0
    %v1630 = vsub.f32 %v1545, 1.0
    %v1631 = vsub.f32 %v1547, 1.0
    %v1632 = vsub.f32 %v1549, 1.0
    %v1633 = vsub.f32 %v1551, 1.0
    %v1634 = vsub.f32 %v1553, 1.0
    %v1635 = vsub.f32 %v1555, 1.0
    %v1636 = vsub.f32 %v1557, 1.0
    %v1637 = vsub.f32 %v1559, 1.0
    %v1638 = vsub.f32 %v1561, 1.0
    %v1639 = vsub.f32 %v1563, 1.0
    %v1640 = vsub.f32 %v1565, 1.0
    %v1641 = vsub.f32 %v1567, 1.0
    %v1642 = vsub.f32 %v1569, 1.0
    %v1643 = vsub.f32 %v1571, 1.0
    %v1644 = vsub.f32 %v1573, 1.0
    %v1645 = vsub.f32 %v1575, 1.0
    %v1646 = vsub.f32 %v1577, 1.0
    %v1647 = vsub.f32 %v1579, 1.0
    %v1648 = vsub.f32 %v1581, 1.0
    %v1649 = vsub.f32 %v1583, 1.0
    %v1650 = vsub.f32 %v1585, 1.0
    %v1651 = vsub.f32 %v1587, 1.0
    %v1652 = vsel %vm1332, %v1022, %v1588
    %v1653 = vsel %vm1333, %v1063, %v1589
    %v1654 = vsel %vm1334, %v1104, %v1590
    %v1655 = vsel %vm1335, %v1145, %v1591
    %v1656 = vsel %vm1336, %v1186, %v1592
    %v1657 = vsel %vm1337, %v1227, %v1593
    %v1658 = vsel %vm1338, %v1268, %v1594
    %v1659 = vsel %vm1339, %v1309, %v1595
    %v1660 = vsel %vm1340, %v1025, %v1596
    %v1661 = vsel %vm1341, %v1066, %v1597
    %v1662 = vsel %vm1342, %v1107, %v1598
    %v1663 = vsel %vm1343, %v1148, %v1599
    %v1664 = vsel %vm1344, %v1189, %v1600
    %v1665 = vsel %vm1345, %v1230, %v1601
    %v1666 = vsel %vm1346, %v1271, %v1602
    %v1667 = vsel %vm1347, %v1312, %v1603
    %v1668 = vsel %vm1348, %v1028, %v1604
    %v1669 = vsel %vm1349, %v1069, %v1605
    %v1670 = vsel %vm1350, %v1110, %v1606
    %v1671 = vsel %vm1351, %v1151, %v1607
    %v1672 = vsel %vm1352, %v1192, %v1608
    %v1673 = vsel %vm1353, %v1233, %v1609
    %v1674 = vsel %vm1354, %v1274, %v1610
    %v1675 = vsel %vm1355, %v1315, %v1611
    %v1676 = vsel %vm1356, %v1031, %v1612
    %v1677 = vsel %vm1357, %v1072, %v1613
    %v1678 = vsel %vm1358, %v1113, %v1614
    %v1679 = vsel %vm1359, %v1154, %v1615
    %v1680 = vsel %vm1360, %v1195, %v1616
    %v1681 = vsel %vm1361, %v1236, %v1617
    %v1682 = vsel %vm1362, %v1277, %v1618
    %v1683 = vsel %vm1363, %v1318, %v1619
    %v1684 = vsel %vm1364, %v1034, %v1620
    %v1685 = vsel %vm1365, %v1075, %v1621
    %v1686 = vsel %vm1366, %v1116, %v1622
    %v1687 = vsel %vm1367, %v1157, %v1623
    %v1688 = vsel %vm1368, %v1198, %v1624
    %v1689 = vsel %vm1369, %v1239, %v1625
    %v1690 = vsel %vm1370, %v1280, %v1626
    %v1691 = vsel %vm1371, %v1321, %v1627
    %v1692 = vsel %vm1372, %v1037, %v1628
    %v1693 = vsel %vm1373, %v1078, %v1629
    %v1694 = vsel %vm1374, %v1119, %v1630
    %v1695 = vsel %vm1375, %v1160, %v1631
    %v1696 = vsel %vm1376, %v1201, %v1632
    %v1697 = vsel %vm1377, %v1242, %v1633
    %v1698 = vsel %vm1378, %v1283, %v1634
    %v1699 = vsel %vm1379, %v1324, %v1635
    %v1700 = vsel %vm1380, %v1040, %v1636
    %v1701 = vsel %vm1381, %v1081, %v1637
    %v1702 = vsel %vm1382, %v1122, %v1638
    %v1703 = vsel %vm1383, %v1163, %v1639
    %v1704 = vsel %vm1384, %v1204, %v1640
    %v1705 = vsel %vm1385, %v1245, %v1641
    %v1706 = vsel %vm1386, %v1286, %v1642
    %v1707 = vsel %vm1387, %v1327, %v1643
    %v1708 = vsel %vm1388, %v1043, %v1644
    %v1709 = vsel %vm1389, %v1084, %v1645
    %v1710 = vsel %vm1390, %v1125, %v1646
    %v1711 = vsel %vm1391, %v1166, %v1647
    %v1712 = vsel %vm1392, %v1207, %v1648
    %v1713 = vsel %vm1393, %v1248, %v1649
    %v1714 = vsel %vm1394, %v1289, %v1650
    %v1715 = vsel %vm1395, %v1330, %v1651
    %v1716 = vld [vmem:[%s12] sm:$0xff]
    %v1718 = vsel %vm64, %v1716, 0
    %1720 = vmatpush.msra.mxu0 0.0
    %1721 = vmatpush.msra.mxu0 0.0
    %1722 = vmatpush.msra.mxu0 0.0
    %1723 = vmatpush.msra.mxu0 0.0
    %1724 = vmatpush.msra.mxu0 0.0
    %1725 = vmatpush.msra.mxu0 0.0
    %1726 = vmatpush.msra.mxu0 0.0
    %1727 = vmatpush.msra.mxu0 0.0
    %1728 = vmatpush.msra.mxu0 %v1708
    %1729 = vmatpush.msra.mxu0 %v1700
    %1730 = vmatpush.msra.mxu0 %v1692
    %1731 = vmatpush.msra.mxu0 %v1684
    %1732 = vmatpush.msra.mxu0 %v1676
    %1733 = vmatpush.msra.mxu0 %v1668
    %1734 = vmatpush.msra.mxu0 %v1660
    %1735 = vmatpush.msra.mxu0 %v1652
    %1736 = vmatmul.f32.gmra.mxu0 %v1718
    %v1737 = vpop.f32.mrf.mxu0
    %v1738 = vadd.f32 0.0, %v1737
    %1739 = vdwg.mxu0
    %1740 = vmatpush.msra.mxu0 0.0
    %1741 = vmatpush.msra.mxu0 0.0
    %1742 = vmatpush.msra.mxu0 0.0
    %1743 = vmatpush.msra.mxu0 0.0
    %1744 = vmatpush.msra.mxu0 0.0
    %1745 = vmatpush.msra.mxu0 0.0
    %1746 = vmatpush.msra.mxu0 0.0
    %1747 = vmatpush.msra.mxu0 0.0
    %1748 = vmatpush.msra.mxu0 %v1709
    %1749 = vmatpush.msra.mxu0 %v1701
    %1750 = vmatpush.msra.mxu0 %v1693
    %1751 = vmatpush.msra.mxu0 %v1685
    %1752 = vmatpush.msra.mxu0 %v1677
    %1753 = vmatpush.msra.mxu0 %v1669
    %1754 = vmatpush.msra.mxu0 %v1661
    %1755 = vmatpush.msra.mxu0 %v1653
    %1756 = vmatmul.f32.gmra.mxu0 %v1718
    %v1757 = vpop.f32.mrf.mxu0
    %v1758 = vadd.f32 0.0, %v1757
    %1759 = vdwg.mxu0
    %1760 = vmatpush.msra.mxu0 0.0
    %1761 = vmatpush.msra.mxu0 0.0
    %1762 = vmatpush.msra.mxu0 0.0
    %1763 = vmatpush.msra.mxu0 0.0
    %1764 = vmatpush.msra.mxu0 0.0
    %1765 = vmatpush.msra.mxu0 0.0
    %1766 = vmatpush.msra.mxu0 0.0
    %1767 = vmatpush.msra.mxu0 0.0
    %1768 = vmatpush.msra.mxu0 %v1710
    %1769 = vmatpush.msra.mxu0 %v1702
    %1770 = vmatpush.msra.mxu0 %v1694
    %1771 = vmatpush.msra.mxu0 %v1686
    %1772 = vmatpush.msra.mxu0 %v1678
    %1773 = vmatpush.msra.mxu0 %v1670
    %1774 = vmatpush.msra.mxu0 %v1662
    %1775 = vmatpush.msra.mxu0 %v1654
    %1776 = vmatmul.f32.gmra.mxu0 %v1718
    %v1777 = vpop.f32.mrf.mxu0
    %v1778 = vadd.f32 0.0, %v1777
    %1779 = vdwg.mxu0
    %1780 = vmatpush.msra.mxu0 0.0
    %1781 = vmatpush.msra.mxu0 0.0
    %1782 = vmatpush.msra.mxu0 0.0
    %1783 = vmatpush.msra.mxu0 0.0
    %1784 = vmatpush.msra.mxu0 0.0
    %1785 = vmatpush.msra.mxu0 0.0
    %1786 = vmatpush.msra.mxu0 0.0
    %1787 = vmatpush.msra.mxu0 0.0
    %1788 = vmatpush.msra.mxu0 %v1711
    %1789 = vmatpush.msra.mxu0 %v1703
    %1790 = vmatpush.msra.mxu0 %v1695
    %1791 = vmatpush.msra.mxu0 %v1687
    %1792 = vmatpush.msra.mxu0 %v1679
    %1793 = vmatpush.msra.mxu0 %v1671
    %1794 = vmatpush.msra.mxu0 %v1663
    %1795 = vmatpush.msra.mxu0 %v1655
    %1796 = vmatmul.f32.gmra.mxu0 %v1718
    %v1797 = vpop.f32.mrf.mxu0
    %v1798 = vadd.f32 0.0, %v1797
    %1799 = vdwg.mxu0
    %1800 = vmatpush.msra.mxu0 0.0
    %1801 = vmatpush.msra.mxu0 0.0
    %1802 = vmatpush.msra.mxu0 0.0
    %1803 = vmatpush.msra.mxu0 0.0
    %1804 = vmatpush.msra.mxu0 0.0
    %1805 = vmatpush.msra.mxu0 0.0
    %1806 = vmatpush.msra.mxu0 0.0
    %1807 = vmatpush.msra.mxu0 0.0
    %1808 = vmatpush.msra.mxu0 %v1712
    %1809 = vmatpush.msra.mxu0 %v1704
    %1810 = vmatpush.msra.mxu0 %v1696
    %1811 = vmatpush.msra.mxu0 %v1688
    %1812 = vmatpush.msra.mxu0 %v1680
    %1813 = vmatpush.msra.mxu0 %v1672
    %1814 = vmatpush.msra.mxu0 %v1664
    %1815 = vmatpush.msra.mxu0 %v1656
    %1816 = vmatmul.f32.gmra.mxu0 %v1718
    %v1817 = vpop.f32.mrf.mxu0
    %v1818 = vadd.f32 0.0, %v1817
    %1819 = vdwg.mxu0
    %1820 = vmatpush.msra.mxu0 0.0
    %1821 = vmatpush.msra.mxu0 0.0
    %1822 = vmatpush.msra.mxu0 0.0
    %1823 = vmatpush.msra.mxu0 0.0
    %1824 = vmatpush.msra.mxu0 0.0
    %1825 = vmatpush.msra.mxu0 0.0
    %1826 = vmatpush.msra.mxu0 0.0
    %1827 = vmatpush.msra.mxu0 0.0
    %1828 = vmatpush.msra.mxu0 %v1713
    %1829 = vmatpush.msra.mxu0 %v1705
    %1830 = vmatpush.msra.mxu0 %v1697
    %1831 = vmatpush.msra.mxu0 %v1689
    %1832 = vmatpush.msra.mxu0 %v1681
    %1833 = vmatpush.msra.mxu0 %v1673
    %1834 = vmatpush.msra.mxu0 %v1665
    %1835 = vmatpush.msra.mxu0 %v1657
    %1836 = vmatmul.f32.gmra.mxu0 %v1718
    %v1837 = vpop.f32.mrf.mxu0
    %v1838 = vadd.f32 0.0, %v1837
    %1839 = vdwg.mxu0
    %1840 = vmatpush.msra.mxu0 0.0
    %1841 = vmatpush.msra.mxu0 0.0
    %1842 = vmatpush.msra.mxu0 0.0
    %1843 = vmatpush.msra.mxu0 0.0
    %1844 = vmatpush.msra.mxu0 0.0
    %1845 = vmatpush.msra.mxu0 0.0
    %1846 = vmatpush.msra.mxu0 0.0
    %1847 = vmatpush.msra.mxu0 0.0
    %1848 = vmatpush.msra.mxu0 %v1714
    %1849 = vmatpush.msra.mxu0 %v1706
    %1850 = vmatpush.msra.mxu0 %v1698
    %1851 = vmatpush.msra.mxu0 %v1690
    %1852 = vmatpush.msra.mxu0 %v1682
    %1853 = vmatpush.msra.mxu0 %v1674
    %1854 = vmatpush.msra.mxu0 %v1666
    %1855 = vmatpush.msra.mxu0 %v1658
    %1856 = vmatmul.f32.gmra.mxu0 %v1718
    %v1857 = vpop.f32.mrf.mxu0
    %v1858 = vadd.f32 0.0, %v1857
    %1859 = vdwg.mxu0
    %1860 = vmatpush.msra.mxu0 0.0
    %1861 = vmatpush.msra.mxu0 0.0
    %1862 = vmatpush.msra.mxu0 0.0
    %1863 = vmatpush.msra.mxu0 0.0
    %1864 = vmatpush.msra.mxu0 0.0
    %1865 = vmatpush.msra.mxu0 0.0
    %1866 = vmatpush.msra.mxu0 0.0
    %1867 = vmatpush.msra.mxu0 0.0
    %1868 = vmatpush.msra.mxu0 %v1715
    %1869 = vmatpush.msra.mxu0 %v1707
    %1870 = vmatpush.msra.mxu0 %v1699
    %1871 = vmatpush.msra.mxu0 %v1691
    %1872 = vmatpush.msra.mxu0 %v1683
    %1873 = vmatpush.msra.mxu0 %v1675
    %1874 = vmatpush.msra.mxu0 %v1667
    %1875 = vmatpush.msra.mxu0 %v1659
    %1876 = vmatmul.f32.gmra.mxu0 %v1718
    %v1877 = vpop.f32.mrf.mxu0
    %v1878 = vadd.f32 0.0, %v1877
    %1879 = vdwg.mxu0
    %v1880 = vld [vmem:[%s13] sm:$0xff]
    %v1881 = vld [vmem:[%s13 + $0x8] sm:$0xff]
    %v1882 = vld [vmem:[%s13 + $0x10] sm:$0xff]
    %v1883 = vld [vmem:[%s13 + $0x18] sm:$0xff]
    %v1884 = vld [vmem:[%s13 + $0x20] sm:$0xff]
    %v1885 = vld [vmem:[%s13 + $0x28] sm:$0xff]
    %v1886 = vld [vmem:[%s13 + $0x30] sm:$0xff]
    %v1887 = vld [vmem:[%s13 + $0x38] sm:$0xff]
    %v1888 = vld [vmem:[%s13 + $0x40] sm:$0xff]
    %v1889 = vld [vmem:[%s13 + $0x48] sm:$0xff]
    %v1890 = vld [vmem:[%s13 + $0x50] sm:$0xff]
    %v1891 = vld [vmem:[%s13 + $0x58] sm:$0xff]
    %v1892 = vld [vmem:[%s13 + $0x60] sm:$0xff]
    %v1893 = vld [vmem:[%s13 + $0x68] sm:$0xff]
    %v1894 = vld [vmem:[%s13 + $0x70] sm:$0xff]
    %v1895 = vld [vmem:[%s13 + $0x78] sm:$0xff]
    %v1896 = vld [vmem:[%s13 + $0x80] sm:$0xff]
    %v1897 = vld [vmem:[%s13 + $0x88] sm:$0xff]
    %v1898 = vld [vmem:[%s13 + $0x90] sm:$0xff]
    %v1899 = vld [vmem:[%s13 + $0x98] sm:$0xff]
    %v1900 = vld [vmem:[%s13 + $0xa0] sm:$0xff]
    %v1901 = vld [vmem:[%s13 + $0xa8] sm:$0xff]
    %v1902 = vld [vmem:[%s13 + $0xb0] sm:$0xff]
    %v1903 = vld [vmem:[%s13 + $0xb8] sm:$0xff]
    %v1904 = vld [vmem:[%s13 + $0xc0] sm:$0xff]
    %v1905 = vld [vmem:[%s13 + $0xc8] sm:$0xff]
    %v1906 = vld [vmem:[%s13 + $0xd0] sm:$0xff]
    %v1907 = vld [vmem:[%s13 + $0xd8] sm:$0xff]
    %v1908 = vld [vmem:[%s13 + $0xe0] sm:$0xff]
    %v1909 = vld [vmem:[%s13 + $0xe8] sm:$0xff]
    %v1910 = vld [vmem:[%s13 + $0xf0] sm:$0xff]
    %v1911 = vld [vmem:[%s13 + $0xf8] sm:$0xff]
    %v1912 = vld [vmem:[%s13 + $0x100] sm:$0xff]
    %v1913 = vld [vmem:[%s13 + $0x108] sm:$0xff]
    %v1914 = vld [vmem:[%s13 + $0x110] sm:$0xff]
    %v1915 = vld [vmem:[%s13 + $0x118] sm:$0xff]
    %v1916 = vld [vmem:[%s13 + $0x120] sm:$0xff]
    %v1917 = vld [vmem:[%s13 + $0x128] sm:$0xff]
    %v1918 = vld [vmem:[%s13 + $0x130] sm:$0xff]
    %v1919 = vld [vmem:[%s13 + $0x138] sm:$0xff]
    %v1920 = vld [vmem:[%s13 + $0x140] sm:$0xff]
    %v1921 = vld [vmem:[%s13 + $0x148] sm:$0xff]
    %v1922 = vld [vmem:[%s13 + $0x150] sm:$0xff]
    %v1923 = vld [vmem:[%s13 + $0x158] sm:$0xff]
    %v1924 = vld [vmem:[%s13 + $0x160] sm:$0xff]
    %v1925 = vld [vmem:[%s13 + $0x168] sm:$0xff]
    %v1926 = vld [vmem:[%s13 + $0x170] sm:$0xff]
    %v1927 = vld [vmem:[%s13 + $0x178] sm:$0xff]
    %v1928 = vld [vmem:[%s13 + $0x180] sm:$0xff]
    %v1929 = vld [vmem:[%s13 + $0x188] sm:$0xff]
    %v1930 = vld [vmem:[%s13 + $0x190] sm:$0xff]
    %v1931 = vld [vmem:[%s13 + $0x198] sm:$0xff]
    %v1932 = vld [vmem:[%s13 + $0x1a0] sm:$0xff]
    %v1933 = vld [vmem:[%s13 + $0x1a8] sm:$0xff]
    %v1934 = vld [vmem:[%s13 + $0x1b0] sm:$0xff]
    %v1935 = vld [vmem:[%s13 + $0x1b8] sm:$0xff]
    %v1936 = vld [vmem:[%s13 + $0x1c0] sm:$0xff]
    %v1937 = vld [vmem:[%s13 + $0x1c8] sm:$0xff]
    %v1938 = vld [vmem:[%s13 + $0x1d0] sm:$0xff]
    %v1939 = vld [vmem:[%s13 + $0x1d8] sm:$0xff]
    %v1940 = vld [vmem:[%s13 + $0x1e0] sm:$0xff]
    %v1941 = vld [vmem:[%s13 + $0x1e8] sm:$0xff]
    %v1942 = vld [vmem:[%s13 + $0x1f0] sm:$0xff]
    %v1943 = vld [vmem:[%s13 + $0x1f8] sm:$0xff]
    %v1944 = vld [vmem:[%s13 + $0x200] sm:$0xff]
    %v1945 = vld [vmem:[%s13 + $0x208] sm:$0xff]
    %v1946 = vld [vmem:[%s13 + $0x210] sm:$0xff]
    %v1947 = vld [vmem:[%s13 + $0x218] sm:$0xff]
    %v1948 = vld [vmem:[%s13 + $0x220] sm:$0xff]
    %v1949 = vld [vmem:[%s13 + $0x228] sm:$0xff]
    %v1950 = vld [vmem:[%s13 + $0x230] sm:$0xff]
    %v1951 = vld [vmem:[%s13 + $0x238] sm:$0xff]
    %v1952 = vld [vmem:[%s13 + $0x240] sm:$0xff]
    %v1953 = vld [vmem:[%s13 + $0x248] sm:$0xff]
    %v1954 = vld [vmem:[%s13 + $0x250] sm:$0xff]
    %v1955 = vld [vmem:[%s13 + $0x258] sm:$0xff]
    %v1956 = vld [vmem:[%s13 + $0x260] sm:$0xff]
    %v1957 = vld [vmem:[%s13 + $0x268] sm:$0xff]
    %v1958 = vld [vmem:[%s13 + $0x270] sm:$0xff]
    %v1959 = vld [vmem:[%s13 + $0x278] sm:$0xff]
    %v1960 = vld [vmem:[%s13 + $0x280] sm:$0xff]
    %v1961 = vld [vmem:[%s13 + $0x288] sm:$0xff]
    %v1962 = vld [vmem:[%s13 + $0x290] sm:$0xff]
    %v1963 = vld [vmem:[%s13 + $0x298] sm:$0xff]
    %v1964 = vld [vmem:[%s13 + $0x2a0] sm:$0xff]
    %v1965 = vld [vmem:[%s13 + $0x2a8] sm:$0xff]
    %v1966 = vld [vmem:[%s13 + $0x2b0] sm:$0xff]
    %v1967 = vld [vmem:[%s13 + $0x2b8] sm:$0xff]
    %v1968 = vld [vmem:[%s13 + $0x2c0] sm:$0xff]
    %v1969 = vld [vmem:[%s13 + $0x2c8] sm:$0xff]
    %v1970 = vld [vmem:[%s13 + $0x2d0] sm:$0xff]
    %v1971 = vld [vmem:[%s13 + $0x2d8] sm:$0xff]
    %v1972 = vld [vmem:[%s13 + $0x2e0] sm:$0xff]
    %v1973 = vld [vmem:[%s13 + $0x2e8] sm:$0xff]
    %v1974 = vld [vmem:[%s13 + $0x2f0] sm:$0xff]
    %v1975 = vld [vmem:[%s13 + $0x2f8] sm:$0xff]
    %v1976 = vld [vmem:[%s13 + $0x300] sm:$0xff]
    %v1977 = vld [vmem:[%s13 + $0x308] sm:$0xff]
    %v1978 = vld [vmem:[%s13 + $0x310] sm:$0xff]
    %v1979 = vld [vmem:[%s13 + $0x318] sm:$0xff]
    %v1980 = vld [vmem:[%s13 + $0x320] sm:$0xff]
    %v1981 = vld [vmem:[%s13 + $0x328] sm:$0xff]
    %v1982 = vld [vmem:[%s13 + $0x330] sm:$0xff]
    %v1983 = vld [vmem:[%s13 + $0x338] sm:$0xff]
    %v1984 = vld [vmem:[%s13 + $0x340] sm:$0xff]
    %v1985 = vld [vmem:[%s13 + $0x348] sm:$0xff]
    %v1986 = vld [vmem:[%s13 + $0x350] sm:$0xff]
    %v1987 = vld [vmem:[%s13 + $0x358] sm:$0xff]
    %v1988 = vld [vmem:[%s13 + $0x360] sm:$0xff]
    %v1989 = vld [vmem:[%s13 + $0x368] sm:$0xff]
    %v1990 = vld [vmem:[%s13 + $0x370] sm:$0xff]
    %v1991 = vld [vmem:[%s13 + $0x378] sm:$0xff]
    %v1992 = vld [vmem:[%s13 + $0x380] sm:$0xff]
    %v1993 = vld [vmem:[%s13 + $0x388] sm:$0xff]
    %v1994 = vld [vmem:[%s13 + $0x390] sm:$0xff]
    %v1995 = vld [vmem:[%s13 + $0x398] sm:$0xff]
    %v1996 = vld [vmem:[%s13 + $0x3a0] sm:$0xff]
    %v1997 = vld [vmem:[%s13 + $0x3a8] sm:$0xff]
    %v1998 = vld [vmem:[%s13 + $0x3b0] sm:$0xff]
    %v1999 = vld [vmem:[%s13 + $0x3b8] sm:$0xff]
    %v2000 = vld [vmem:[%s13 + $0x3c0] sm:$0xff]
    %v2001 = vld [vmem:[%s13 + $0x3c8] sm:$0xff]
    %v2002 = vld [vmem:[%s13 + $0x3d0] sm:$0xff]
    %v2003 = vld [vmem:[%s13 + $0x3d8] sm:$0xff]
    %v2004 = vld [vmem:[%s13 + $0x3e0] sm:$0xff]
    %v2005 = vld [vmem:[%s13 + $0x3e8] sm:$0xff]
    %v2006 = vld [vmem:[%s13 + $0x3f0] sm:$0xff]
    %v2007 = vld [vmem:[%s13 + $0x3f8] sm:$0xff]
    %v2008 = vld [vmem:[%s14] sm:$0x1]
    %v2010 = vperm.slane %v2008, 0
    %2012 = vmatpush.msra.mxu0 %v1895
    %2013 = vmatpush.msra.mxu0 %v1894
    %2014 = vmatpush.msra.mxu0 %v1893
    %2015 = vmatpush.msra.mxu0 %v1892
    %2016 = vmatpush.msra.mxu0 %v1891
    %2017 = vmatpush.msra.mxu0 %v1890
    %2018 = vmatpush.msra.mxu0 %v1889
    %2019 = vmatpush.msra.mxu0 %v1888
    %2020 = vmatpush.msra.mxu0 %v1887
    %2021 = vmatpush.msra.mxu0 %v1886
    %2022 = vmatpush.msra.mxu0 %v1885
    %2023 = vmatpush.msra.mxu0 %v1884
    %2024 = vmatpush.msra.mxu0 %v1883
    %2025 = vmatpush.msra.mxu0 %v1882
    %2026 = vmatpush.msra.mxu0 %v1881
    %2027 = vmatpush.msra.mxu0 %v1880
    %2028 = vmatmul.f32.gmra.mxu0 %v1738
    %v2029 = vpop.f32.mrf.mxu0
    %v2030 = vadd.f32 %v2010, %v2029
    %2031 = vdwg.mxu0
    %2032 = vmatpush.msra.mxu0 %v1911
    %2033 = vmatpush.msra.mxu0 %v1910
    %2034 = vmatpush.msra.mxu0 %v1909
    %2035 = vmatpush.msra.mxu0 %v1908
    %2036 = vmatpush.msra.mxu0 %v1907
    %2037 = vmatpush.msra.mxu0 %v1906
    %2038 = vmatpush.msra.mxu0 %v1905
    %2039 = vmatpush.msra.mxu0 %v1904
    %2040 = vmatpush.msra.mxu0 %v1903
    %2041 = vmatpush.msra.mxu0 %v1902
    %2042 = vmatpush.msra.mxu0 %v1901
    %2043 = vmatpush.msra.mxu0 %v1900
    %2044 = vmatpush.msra.mxu0 %v1899
    %2045 = vmatpush.msra.mxu0 %v1898
    %2046 = vmatpush.msra.mxu0 %v1897
    %2047 = vmatpush.msra.mxu0 %v1896
    %2048 = vmatmul.f32.gmra.mxu0 %v1758
    %v2049 = vpop.f32.mrf.mxu0
    %v2050 = vadd.f32 %v2030, %v2049
    %2051 = vdwg.mxu0
    %2052 = vmatpush.msra.mxu0 %v1927
    %2053 = vmatpush.msra.mxu0 %v1926
    %2054 = vmatpush.msra.mxu0 %v1925
    %2055 = vmatpush.msra.mxu0 %v1924
    %2056 = vmatpush.msra.mxu0 %v1923
    %2057 = vmatpush.msra.mxu0 %v1922
    %2058 = vmatpush.msra.mxu0 %v1921
    %2059 = vmatpush.msra.mxu0 %v1920
    %2060 = vmatpush.msra.mxu0 %v1919
    %2061 = vmatpush.msra.mxu0 %v1918
    %2062 = vmatpush.msra.mxu0 %v1917
    %2063 = vmatpush.msra.mxu0 %v1916
    %2064 = vmatpush.msra.mxu0 %v1915
    %2065 = vmatpush.msra.mxu0 %v1914
    %2066 = vmatpush.msra.mxu0 %v1913
    %2067 = vmatpush.msra.mxu0 %v1912
    %2068 = vmatmul.f32.gmra.mxu0 %v1778
    %v2069 = vpop.f32.mrf.mxu0
    %v2070 = vadd.f32 %v2050, %v2069
    %2071 = vdwg.mxu0
    %2072 = vmatpush.msra.mxu0 %v1943
    %2073 = vmatpush.msra.mxu0 %v1942
    %2074 = vmatpush.msra.mxu0 %v1941
    %2075 = vmatpush.msra.mxu0 %v1940
    %2076 = vmatpush.msra.mxu0 %v1939
    %2077 = vmatpush.msra.mxu0 %v1938
    %2078 = vmatpush.msra.mxu0 %v1937
    %2079 = vmatpush.msra.mxu0 %v1936
    %2080 = vmatpush.msra.mxu0 %v1935
    %2081 = vmatpush.msra.mxu0 %v1934
    %2082 = vmatpush.msra.mxu0 %v1933
    %2083 = vmatpush.msra.mxu0 %v1932
    %2084 = vmatpush.msra.mxu0 %v1931
    %2085 = vmatpush.msra.mxu0 %v1930
    %2086 = vmatpush.msra.mxu0 %v1929
    %2087 = vmatpush.msra.mxu0 %v1928
    %2088 = vmatmul.f32.gmra.mxu0 %v1798
    %v2089 = vpop.f32.mrf.mxu0
    %v2090 = vadd.f32 %v2070, %v2089
    %2091 = vdwg.mxu0
    %2092 = vmatpush.msra.mxu0 %v1959
    %2093 = vmatpush.msra.mxu0 %v1958
    %2094 = vmatpush.msra.mxu0 %v1957
    %2095 = vmatpush.msra.mxu0 %v1956
    %2096 = vmatpush.msra.mxu0 %v1955
    %2097 = vmatpush.msra.mxu0 %v1954
    %2098 = vmatpush.msra.mxu0 %v1953
    %2099 = vmatpush.msra.mxu0 %v1952
    %2100 = vmatpush.msra.mxu0 %v1951
    %2101 = vmatpush.msra.mxu0 %v1950
    %2102 = vmatpush.msra.mxu0 %v1949
    %2103 = vmatpush.msra.mxu0 %v1948
    %2104 = vmatpush.msra.mxu0 %v1947
    %2105 = vmatpush.msra.mxu0 %v1946
    %2106 = vmatpush.msra.mxu0 %v1945
    %2107 = vmatpush.msra.mxu0 %v1944
    %2108 = vmatmul.f32.gmra.mxu0 %v1818
    %v2109 = vpop.f32.mrf.mxu0
    %v2110 = vadd.f32 %v2090, %v2109
    %2111 = vdwg.mxu0
    %2112 = vmatpush.msra.mxu0 %v1975
    %2113 = vmatpush.msra.mxu0 %v1974
    %2114 = vmatpush.msra.mxu0 %v1973
    %2115 = vmatpush.msra.mxu0 %v1972
    %2116 = vmatpush.msra.mxu0 %v1971
    %2117 = vmatpush.msra.mxu0 %v1970
    %2118 = vmatpush.msra.mxu0 %v1969
    %2119 = vmatpush.msra.mxu0 %v1968
    %2120 = vmatpush.msra.mxu0 %v1967
    %2121 = vmatpush.msra.mxu0 %v1966
    %2122 = vmatpush.msra.mxu0 %v1965
    %2123 = vmatpush.msra.mxu0 %v1964
    %2124 = vmatpush.msra.mxu0 %v1963
    %2125 = vmatpush.msra.mxu0 %v1962
    %2126 = vmatpush.msra.mxu0 %v1961
    %2127 = vmatpush.msra.mxu0 %v1960
    %2128 = vmatmul.f32.gmra.mxu0 %v1838
    %v2129 = vpop.f32.mrf.mxu0
    %v2130 = vadd.f32 %v2110, %v2129
    %2131 = vdwg.mxu0
    %2132 = vmatpush.msra.mxu0 %v1991
    %2133 = vmatpush.msra.mxu0 %v1990
    %2134 = vmatpush.msra.mxu0 %v1989
    %2135 = vmatpush.msra.mxu0 %v1988
    %2136 = vmatpush.msra.mxu0 %v1987
    %2137 = vmatpush.msra.mxu0 %v1986
    %2138 = vmatpush.msra.mxu0 %v1985
    %2139 = vmatpush.msra.mxu0 %v1984
    %2140 = vmatpush.msra.mxu0 %v1983
    %2141 = vmatpush.msra.mxu0 %v1982
    %2142 = vmatpush.msra.mxu0 %v1981
    %2143 = vmatpush.msra.mxu0 %v1980
    %2144 = vmatpush.msra.mxu0 %v1979
    %2145 = vmatpush.msra.mxu0 %v1978
    %2146 = vmatpush.msra.mxu0 %v1977
    %2147 = vmatpush.msra.mxu0 %v1976
    %2148 = vmatmul.f32.gmra.mxu0 %v1858
    %v2149 = vpop.f32.mrf.mxu0
    %v2150 = vadd.f32 %v2130, %v2149
    %2151 = vdwg.mxu0
    %2152 = vmatpush.msra.mxu0 %v2007
    %2153 = vmatpush.msra.mxu0 %v2006
    %2154 = vmatpush.msra.mxu0 %v2005
    %2155 = vmatpush.msra.mxu0 %v2004
    %2156 = vmatpush.msra.mxu0 %v2003
    %2157 = vmatpush.msra.mxu0 %v2002
    %2158 = vmatpush.msra.mxu0 %v2001
    %2159 = vmatpush.msra.mxu0 %v2000
    %2160 = vmatpush.msra.mxu0 %v1999
    %2161 = vmatpush.msra.mxu0 %v1998
    %2162 = vmatpush.msra.mxu0 %v1997
    %2163 = vmatpush.msra.mxu0 %v1996
    %2164 = vmatpush.msra.mxu0 %v1995
    %2165 = vmatpush.msra.mxu0 %v1994
    %2166 = vmatpush.msra.mxu0 %v1993
    %2167 = vmatpush.msra.mxu0 %v1992
    %2168 = vmatmul.f32.gmra.mxu0 %v1878
    %v2169 = vpop.f32.mrf.mxu0
    %v2170 = vadd.f32 %v2150, %v2169
    %2171 = vdwg.mxu0
    %2173 = vrot.lane.b32.xlu0 %v2170, 32
    %v2174 = vpop.permute.xlu0 %2173
    %v2176 = vsel %vm200, %v158, %v2174
    %2177 = vst.msk [vmem:[#allocation2] sm:$0xff] %vm64, %v2176
    // Predicated region
    $region62: #{mfu_forward.1} parent=1 // pred_check
      _
    $region63: #{mfu_forward.1} parent=1 // pred_check_branch
      %2179 = sbr.rel (0) target = $region65
    $region64: #{mfu_forward.1} parent=1 // pred_region
      %2181 = vsyncadd [#allocation3], 0
      %s2183 = sshll.u32 [#allocation2], 4
      %s2184 = int_to_ptr.vmem [resolvable:$true] %s2183
      %s2185 = sshll.u32 %s15, 4
      %s2186 = int_to_ptr.hbm [resolvable:$true] %s2185
      %2188 = dma.vmem_to_hbm [thread:$0]  %s2184, 128, %s2186, [#allocation3]
    $region65: #{mfu_forward.1} parent=1 // pred_fallthru
      _
    // Predicated region
    $region66: #{mfu_forward.1} parent=1 // pred_check
      _
    $region67: #{mfu_forward.1} parent=1 // pred_check_branch
      %2190 = sbr.rel (0) target = $region69
    $region68: #{mfu_forward.1} parent=1 // pred_region
      %2192 = dma.done [#allocation3], 128
    $region69: #{mfu_forward.1} parent=1 // pred_fallthru
      _
    %2193 = vsyncpa [#allocation3], 1

</llo_original>
